<compile_context>
chip_gen: v5e
topology: v5e:2x2
jax: 0.10.0
libtpu: 0.0.40
codegen_flags: <defaults>
</compile_context>

<pallas_src>
import functools
import math

import jax
import jax.numpy as jnp
import numpy as np
from jax.experimental import pallas as pl
from jax.experimental.pallas import tpu as pltpu

EPS = 1e-12  # torch F.normalize eps


def _dot_bf16(a, b):
    """bf16 x bf16 -> f32 MXU matmul (single pass)."""
    return jnp.dot(a.astype(jnp.bfloat16), b.astype(jnp.bfloat16),
                   preferred_element_type=jnp.float32)


def _l2norm(v):
    # torch.nn.functional.normalize(p=2, dim=-1): v / max(||v||_2, eps)
    n = jnp.sqrt(jnp.sum(v * v, axis=-1, keepdims=True))
    return v / jnp.maximum(n, EPS)


def _softmax_cols(cols):
    """Softmax over a small static list of (B, 1) logit columns (no concat)."""
    m = cols[0]
    for c in cols[1:]:
        m = jnp.maximum(m, c)
    es = [jnp.exp(c - m) for c in cols]
    den = es[0]
    for e in es[1:]:
        den = den + e
    inv = 1.0 / den
    return [e * inv for e in es]


# ------------------------------ fused kernel ------------------------------ #

def fused_pt_kernel(x_ref,        # (S, B, D)     f32 activations
                    wlast_ref,    # (L, D, 2D)    bf16  [Wq^T | Wk[last]^T]
                    blast_ref,    # (L, 1, 2D)    f32   [bq   | bk[last]]
                    wwin_ref,     # (L, W, D, 2D) bf16  [Wk[c]^T | Wfw[c]^T]
                    bwin_ref,     # (L, W, 1, 2D) f32
                    wfc_ref,      # (L, D, D)     bf16  Wfc^T
                    bfc_ref,      # (L, 1, D)     f32
                    wlastf_ref,   # (D, 2D)       bf16  final [Wq^T | Wk[last]^T]
                    blastf_ref,   # (1, 2D)       f32
                    wkf_ref,      # (W, D, D)     bf16  final Wk[c]^T
                    bkf_ref,      # (W, 1, D)     f32
                    out_ref):     # (B, D)        f32
    S, B, D = x_ref.shape
    L = wlast_ref.shape[0]
    W = S - 1

    # Per-channel dense (B, D) tiles; S and L are tiny -> static unroll.
    xs = [x_ref[c].astype(jnp.float32) for c in range(S)]

    for l in range(L):                                   # PTLayer x L
        x_last = xs[W]
        qk = _dot_bf16(x_last, wlast_ref[l]) + blast_ref[l]          # (B, 2D)
        q, k_last = qk[:, :D], qk[:, D:]

        logit_cols, ffw = [], []
        for c in range(W):                               # window channels
            kf = _dot_bf16(xs[c], wwin_ref[l, c]) + bwin_ref[l, c]   # (B, 2D)
            logit_cols.append(jnp.sum(q * kf[:, :D], axis=-1, keepdims=True))
            ffw.append(kf[:, D:])
        logit_cols.append(jnp.sum(q * k_last, axis=-1, keepdims=True))

        attn = _softmax_cols(logit_cols)                 # list of (B, 1)
        x_cent = attn[0] * xs[0]
        for c in range(1, S):
            x_cent = x_cent + attn[c] * xs[c]
        x_cent = _l2norm(x_cent)
        # TODO(synk): nn.Dropout(p) omitted — identity (eval-mode semantics).
        x_cent = _dot_bf16(x_cent, wfc_ref[l]) + bfc_ref[l]          # ff_cent
        x_cent = _l2norm(x_cent + x_last)

        new_xs = [_l2norm(ffw[c] + xs[c]) for c in range(W)]         # ff_window
        new_xs.append(x_cent)
        xs = new_xs

    # ------------------------------ final layer ---------------------------- #
    x_last = xs[W]
    qk = _dot_bf16(x_last, wlastf_ref[...]) + blastf_ref[...]
    q, k_last = qk[:, :D], qk[:, D:]
    logit_cols = []
    for c in range(W):
        k_c = _dot_bf16(xs[c], wkf_ref[c]) + bkf_ref[c]
        logit_cols.append(jnp.sum(q * k_c, axis=-1, keepdims=True))
    logit_cols.append(jnp.sum(q * k_last, axis=-1, keepdims=True))
    attn = _softmax_cols(logit_cols)
    x_cent = attn[0] * xs[0]
    for c in range(1, S):
        x_cent = x_cent + attn[c] * xs[c]
    out_ref[...] = _l2norm(x_cent + x_last).astype(out_ref.dtype)


# --------------------- host-side weight packing / wrapper ------------------ #

def pack_params(layer_params, final_params):
    """Pre-transpose and coalesce weights; weight matrices stored bf16."""
    d = final_params["wq"].shape[0]
    s = final_params["wk"].shape[0]
    w = s - 1
    bf16 = jnp.bfloat16

    def _wlast(p):
        return jnp.concatenate([p["wq"].T, p["wk"][s - 1].T], axis=1).astype(bf16)

    def _blast(p):
        return jnp.concatenate([p["bq"], p["bk"][s - 1]]).reshape(1, 2 * d)

    wlast = jnp.stack([_wlast(p) for p in layer_params])                   # (L, D, 2D)
    blast = jnp.stack([_blast(p) for p in layer_params])                   # (L, 1, 2D)
    wwin = jnp.stack([jnp.stack([
        jnp.concatenate([p["wk"][c].T, p["wfw"][c].T], axis=1).astype(bf16)
        for c in range(w)]) for p in layer_params])                        # (L, W, D, 2D)
    bwin = jnp.stack([jnp.stack([
        jnp.concatenate([p["bk"][c], p["bfw"][c]]).reshape(1, 2 * d)
        for c in range(w)]) for p in layer_params])                        # (L, W, 1, 2D)
    wfc = jnp.stack([p["wfc"].T.astype(bf16) for p in layer_params])       # (L, D, D)
    bfc = jnp.stack([p["bfc"].reshape(1, d) for p in layer_params])        # (L, 1, D)

    wlastf = _wlast(final_params)                                          # (D, 2D)
    blastf = _blast(final_params)                                          # (1, 2D)
    wkf = jnp.stack([final_params["wk"][c].T.astype(bf16) for c in range(w)])   # (W, D, D)
    bkf = jnp.stack([final_params["bk"][c].reshape(1, d) for c in range(w)])    # (W, 1, D)
    return (wlast, blast, wwin, bwin, wfc, bfc, wlastf, blastf, wkf, bkf)


@jax.jit
def positional_transformer(x, layer_params, final_params):
    B, S, D = x.shape
    packed = pack_params(layer_params, final_params)
    x_sbd = jnp.transpose(x, (1, 0, 2))            # (S, B, D): dense channel tiles
    out = pl.pallas_call(
        fused_pt_kernel,
        out_shape=jax.ShapeDtypeStruct((B, D), x.dtype),
        in_specs=[pl.BlockSpec(memory_space=pltpu.MemorySpace.VMEM)] * 11,
        out_specs=pl.BlockSpec(memory_space=pltpu.MemorySpace.VMEM),
    )(x_sbd, *packed)
    return out[:, None, :]                         # (B, 1, D)


# ------------------------- deterministic param init ------------------------ #

def _uniform(key, shape, bound):
    return jax.random.uniform(key, shape, jnp.float32, -bound, bound)


def init_ptlayer(key, d, w):
    ks = jax.random.split(key, 8)
    s = w + 1
    lin_b = 1.0 / math.sqrt(d)     # nn.Linear default bound
    conv_b = 1.0 / math.sqrt(d)    # Conv1d: k = groups / (C_in * kernel) = 1/d
    return dict(
        wq=_uniform(ks[0], (d, d), lin_b),      bq=_uniform(ks[1], (d,), lin_b),
        wk=_uniform(ks[2], (s, d, d), conv_b),  bk=_uniform(ks[3], (s, d), conv_b),
        wfw=_uniform(ks[4], (w, d, d), conv_b), bfw=_uniform(ks[5], (w, d), conv_b),
        wfc=_uniform(ks[6], (d, d), lin_b),     bfc=_uniform(ks[7], (d,), lin_b),
    )


def init_ptfinal(key, d, w):
    ks = jax.random.split(key, 4)
    s = w + 1
    b = 1.0 / math.sqrt(d)
    return dict(
        wq=_uniform(ks[0], (d, d), b), bq=_uniform(ks[1], (d,), b),
        wk=_uniform(ks[2], (s, d, d), b), bk=_uniform(ks[3], (s, d), b),
    )


# --------------------------- pure-JAX reference ---------------------------- #
# Mirrors the torch module's math (grouped Conv1d == per-channel matmul) using
# the same bf16-in / f32-accumulate dot as the kernel.

def _ref_attention(x, p):
    S = x.shape[1]
    x_last = x[:, -1, :]
    q = _dot_bf16(x_last, p["wq"].T) + p["bq"]
    ks = [_dot_bf16(x[:, c, :], p["wk"][c].T) + p["bk"][c] for c in range(S)]
    logits = jnp.stack([jnp.sum(q * k, axis=-1) for k in ks], axis=-1)    # (B, S)
    attn = jax.nn.softmax(logits, axis=-1)
    x_cent = jnp.zeros_like(x_last)
    for c in range(S):
        x_cent = x_cent + attn[:, c:c + 1] * x[:, c, :]
    return x_cent, x_last


def ref_layer(x, p):
    x_cent, x_last = _ref_attention(x, p)
    x_cent = _l2norm(x_cent)
    x_cent = _dot_bf16(x_cent, p["wfc"].T) + p["bfc"]
    x_cent = _l2norm(x_cent + x_last)
    rows = []
    for c in range(x.shape[1] - 1):
        xw = _dot_bf16(x[:, c, :], p["wfw"][c].T) + p["bfw"][c]
        rows.append(_l2norm(xw + x[:, c, :]))
    rows.append(x_cent)
    return jnp.stack(rows, axis=1)


def ref_final(x, p):
    x_cent, x_last = _ref_attention(x, p)
    return _l2norm(x_cent + x_last)[:, None, :]


# ----------------------------------- main ---------------------------------- #

if __name__ == "__main__":
    D_MODEL, WINDOW, N_LAYERS, BATCH = 128, 1, 3, 8
    S = WINDOW + 1

    key = jax.random.PRNGKey(0)
    kx, kp = jax.random.split(key)
    x = jax.random.normal(kx, (BATCH, S, D_MODEL), jnp.float32)

    pkeys = jax.random.split(kp, N_LAYERS + 1)
    layer_params = [init_ptlayer(pkeys[i], D_MODEL, WINDOW) for i in range(N_LAYERS)]
    final_params = init_ptfinal(pkeys[N_LAYERS], D_MODEL, WINDOW)

    y = positional_transformer(x, layer_params, final_params)
    y = jax.block_until_ready(y)
    assert y.shape == (BATCH, 1, D_MODEL)

    # correctness check against the pure-JAX reference
    y_ref = x
    for p in layer_params:
        y_ref = ref_layer(y_ref, p)
    y_ref = ref_final(y_ref, final_params)
    np.testing.assert_allclose(np.asarray(y), np.asarray(y_ref), atol=2e-3, rtol=2e-3)

    print("KERNEL_OK")
</pallas_src>

<mosaic_0001>
module attributes {stable_mosaic.version = 11 : i64} {
  func.func @fused_pt_kernel(%arg0: memref<2x8x128xf32, #tpu.memory_space<vmem>>, %arg1: memref<3x128x256xbf16, #tpu.memory_space<vmem>>, %arg2: memref<3x1x256xf32, #tpu.memory_space<vmem>>, %arg3: memref<3x1x128x256xbf16, #tpu.memory_space<vmem>>, %arg4: memref<3x1x1x256xf32, #tpu.memory_space<vmem>>, %arg5: memref<3x128x128xbf16, #tpu.memory_space<vmem>>, %arg6: memref<3x1x128xf32, #tpu.memory_space<vmem>>, %arg7: memref<128x256xbf16, #tpu.memory_space<vmem>>, %arg8: memref<1x256xf32, #tpu.memory_space<vmem>>, %arg9: memref<1x128x128xbf16, #tpu.memory_space<vmem>>, %arg10: memref<1x1x128xf32, #tpu.memory_space<vmem>>, %arg11: memref<8x128xf32, #tpu.memory_space<vmem>>) attributes {dimension_semantics = [], scalar_prefetch = 0 : i64, scratch_operands = 0 : i64, tpu.core_type = #tpu.core_type<tc>} {
    %c0 = arith.constant 0 : index
    %c0_0 = arith.constant 0 : index
    %c0_1 = arith.constant 0 : index
    %0 = vector.load %arg0[%c0, %c0_0, %c0_1] : memref<2x8x128xf32, #tpu.memory_space<vmem>>, vector<1x8x128xf32>
    %1 = vector.shape_cast %0 : vector<1x8x128xf32> to vector<8x128xf32>
    %c1 = arith.constant 1 : index
    %c0_2 = arith.constant 0 : index
    %c0_3 = arith.constant 0 : index
    %2 = vector.load %arg0[%c1, %c0_2, %c0_3] : memref<2x8x128xf32, #tpu.memory_space<vmem>>, vector<1x8x128xf32>
    %3 = vector.shape_cast %2 : vector<1x8x128xf32> to vector<8x128xf32>
    %c0_4 = arith.constant 0 : index
    %c0_5 = arith.constant 0 : index
    %c0_6 = arith.constant 0 : index
    %4 = vector.load %arg1[%c0_4, %c0_5, %c0_6] : memref<3x128x256xbf16, #tpu.memory_space<vmem>>, vector<1x128x256xbf16>
    %5 = vector.shape_cast %4 : vector<1x128x256xbf16> to vector<128x256xbf16>
    %6 = arith.truncf %3 : vector<8x128xf32> to vector<8x128xbf16>
    %cst = arith.constant dense<0.000000e+00> : vector<8x256xf32>
    %7 = tpu.matmul %6, %5, %cst {dimension_numbers = #tpu.dot_dimension_numbers<[1], [0], [0], [1], [0, 0, 1, 1], [], []>} : vector<8x128xbf16>, vector<128x256xbf16>, vector<8x256xf32> -> vector<8x256xf32>
    %c0_7 = arith.constant 0 : index
    %c0_8 = arith.constant 0 : index
    %c0_9 = arith.constant 0 : index
    %8 = vector.load %arg2[%c0_7, %c0_8, %c0_9] : memref<3x1x256xf32, #tpu.memory_space<vmem>>, vector<1x1x256xf32>
    %9 = vector.shape_cast %8 : vector<1x1x256xf32> to vector<1x256xf32>
    %10 = vector.broadcast %9 : vector<1x256xf32> to vector<8x256xf32>
    %11 = arith.addf %7, %10 : vector<8x256xf32>
    %12 = vector.extract_strided_slice %11 {offsets = [0, 0], sizes = [8, 128], strides = [1, 1]} : vector<8x256xf32> to vector<8x128xf32>
    %13 = vector.extract_strided_slice %11 {offsets = [0, 128], sizes = [8, 128], strides = [1, 1]} : vector<8x256xf32> to vector<8x128xf32>
    %c0_10 = arith.constant 0 : index
    %c0_11 = arith.constant 0 : index
    %c0_12 = arith.constant 0 : index
    %c0_13 = arith.constant 0 : index
    %14 = vector.load %arg3[%c0_10, %c0_11, %c0_12, %c0_13] : memref<3x1x128x256xbf16, #tpu.memory_space<vmem>>, vector<1x1x128x256xbf16>
    %15 = vector.shape_cast %14 : vector<1x1x128x256xbf16> to vector<128x256xbf16>
    %16 = arith.truncf %1 : vector<8x128xf32> to vector<8x128xbf16>
    %cst_14 = arith.constant dense<0.000000e+00> : vector<8x256xf32>
    %17 = tpu.matmul %16, %15, %cst_14 {dimension_numbers = #tpu.dot_dimension_numbers<[1], [0], [0], [1], [0, 0, 1, 1], [], []>} : vector<8x128xbf16>, vector<128x256xbf16>, vector<8x256xf32> -> vector<8x256xf32>
    %c0_15 = arith.constant 0 : index
    %c0_16 = arith.constant 0 : index
    %c0_17 = arith.constant 0 : index
    %c0_18 = arith.constant 0 : index
    %18 = vector.load %arg4[%c0_15, %c0_16, %c0_17, %c0_18] : memref<3x1x1x256xf32, #tpu.memory_space<vmem>>, vector<1x1x1x256xf32>
    %19 = vector.shape_cast %18 : vector<1x1x1x256xf32> to vector<1x256xf32>
    %20 = vector.broadcast %19 : vector<1x256xf32> to vector<8x256xf32>
    %21 = arith.addf %17, %20 : vector<8x256xf32>
    %22 = vector.extract_strided_slice %21 {offsets = [0, 0], sizes = [8, 128], strides = [1, 1]} : vector<8x256xf32> to vector<8x128xf32>
    %23 = arith.mulf %12, %22 : vector<8x128xf32>
    %cst_19 = arith.constant dense<0.000000e+00> : vector<8xf32>
    %24 = vector.multi_reduction <add>, %23, %cst_19 [1] : vector<8x128xf32> to vector<8xf32>
    %25 = vector.shape_cast %24 : vector<8xf32> to vector<8x1xf32>
    %26 = vector.extract_strided_slice %21 {offsets = [0, 128], sizes = [8, 128], strides = [1, 1]} : vector<8x256xf32> to vector<8x128xf32>
    %27 = arith.mulf %12, %13 : vector<8x128xf32>
    %cst_20 = arith.constant dense<0.000000e+00> : vector<8xf32>
    %28 = vector.multi_reduction <add>, %27, %cst_20 [1] : vector<8x128xf32> to vector<8xf32>
    %29 = vector.shape_cast %28 : vector<8xf32> to vector<8x1xf32>
    %30 = arith.maximumf %25, %29 : vector<8x1xf32>
    %31 = arith.subf %25, %30 : vector<8x1xf32>
    %32 = math.exp %31 : vector<8x1xf32>
    %33 = arith.subf %29, %30 : vector<8x1xf32>
    %34 = math.exp %33 : vector<8x1xf32>
    %35 = arith.addf %32, %34 : vector<8x1xf32>
    %cst_21 = arith.constant 1.000000e+00 : f32
    %36 = vector.broadcast %cst_21 : f32 to vector<8x1xf32>
    %37 = arith.divf %36, %35 : vector<8x1xf32>
    %38 = arith.mulf %32, %37 : vector<8x1xf32>
    %39 = arith.mulf %34, %37 : vector<8x1xf32>
    %40 = vector.broadcast %38 : vector<8x1xf32> to vector<8x128xf32>
    %41 = arith.mulf %40, %1 : vector<8x128xf32>
    %42 = vector.broadcast %39 : vector<8x1xf32> to vector<8x128xf32>
    %43 = arith.mulf %42, %3 : vector<8x128xf32>
    %44 = arith.addf %41, %43 : vector<8x128xf32>
    %45 = arith.mulf %44, %44 : vector<8x128xf32>
    %cst_22 = arith.constant dense<0.000000e+00> : vector<8xf32>
    %46 = vector.multi_reduction <add>, %45, %cst_22 [1] : vector<8x128xf32> to vector<8xf32>
    %47 = vector.shape_cast %46 : vector<8xf32> to vector<8x1xf32>
    %48 = math.sqrt %47 : vector<8x1xf32>
    %cst_23 = arith.constant 9.99999996E-13 : f32
    %49 = vector.broadcast %cst_23 : f32 to vector<8x1xf32>
    %50 = arith.maximumf %48, %49 : vector<8x1xf32>
    %51 = vector.broadcast %50 : vector<8x1xf32> to vector<8x128xf32>
    %52 = arith.divf %44, %51 : vector<8x128xf32>
    %c0_24 = arith.constant 0 : index
    %c0_25 = arith.constant 0 : index
    %c0_26 = arith.constant 0 : index
    %53 = vector.load %arg5[%c0_24, %c0_25, %c0_26] : memref<3x128x128xbf16, #tpu.memory_space<vmem>>, vector<1x128x128xbf16>
    %54 = vector.shape_cast %53 : vector<1x128x128xbf16> to vector<128x128xbf16>
    %55 = arith.truncf %52 : vector<8x128xf32> to vector<8x128xbf16>
    %cst_27 = arith.constant dense<0.000000e+00> : vector<8x128xf32>
    %56 = tpu.matmul %55, %54, %cst_27 {dimension_numbers = #tpu.dot_dimension_numbers<[1], [0], [0], [1], [0, 0, 1, 1], [], []>} : vector<8x128xbf16>, vector<128x128xbf16>, vector<8x128xf32> -> vector<8x128xf32>
    %c0_28 = arith.constant 0 : index
    %c0_29 = arith.constant 0 : index
    %c0_30 = arith.constant 0 : index
    %57 = vector.load %arg6[%c0_28, %c0_29, %c0_30] : memref<3x1x128xf32, #tpu.memory_space<vmem>>, vector<1x1x128xf32>
    %58 = vector.shape_cast %57 : vector<1x1x128xf32> to vector<1x128xf32>
    %59 = vector.broadcast %58 : vector<1x128xf32> to vector<8x128xf32>
    %60 = arith.addf %56, %59 : vector<8x128xf32>
    %61 = arith.addf %60, %3 : vector<8x128xf32>
    %62 = arith.mulf %61, %61 : vector<8x128xf32>
    %cst_31 = arith.constant dense<0.000000e+00> : vector<8xf32>
    %63 = vector.multi_reduction <add>, %62, %cst_31 [1] : vector<8x128xf32> to vector<8xf32>
    %64 = vector.shape_cast %63 : vector<8xf32> to vector<8x1xf32>
    %65 = math.sqrt %64 : vector<8x1xf32>
    %cst_32 = arith.constant 9.99999996E-13 : f32
    %66 = vector.broadcast %cst_32 : f32 to vector<8x1xf32>
    %67 = arith.maximumf %65, %66 : vector<8x1xf32>
    %68 = vector.broadcast %67 : vector<8x1xf32> to vector<8x128xf32>
    %69 = arith.divf %61, %68 : vector<8x128xf32>
    %70 = arith.addf %26, %1 : vector<8x128xf32>
    %71 = arith.mulf %70, %70 : vector<8x128xf32>
    %cst_33 = arith.constant dense<0.000000e+00> : vector<8xf32>
    %72 = vector.multi_reduction <add>, %71, %cst_33 [1] : vector<8x128xf32> to vector<8xf32>
    %73 = vector.shape_cast %72 : vector<8xf32> to vector<8x1xf32>
    %74 = math.sqrt %73 : vector<8x1xf32>
    %cst_34 = arith.constant 9.99999996E-13 : f32
    %75 = vector.broadcast %cst_34 : f32 to vector<8x1xf32>
    %76 = arith.maximumf %74, %75 : vector<8x1xf32>
    %77 = vector.broadcast %76 : vector<8x1xf32> to vector<8x128xf32>
    %78 = arith.divf %70, %77 : vector<8x128xf32>
    %c1_35 = arith.constant 1 : index
    %c0_36 = arith.constant 0 : index
    %c0_37 = arith.constant 0 : index
    %79 = vector.load %arg1[%c1_35, %c0_36, %c0_37] : memref<3x128x256xbf16, #tpu.memory_space<vmem>>, vector<1x128x256xbf16>
    %80 = vector.shape_cast %79 : vector<1x128x256xbf16> to vector<128x256xbf16>
    %81 = arith.truncf %69 : vector<8x128xf32> to vector<8x128xbf16>
    %cst_38 = arith.constant dense<0.000000e+00> : vector<8x256xf32>
    %82 = tpu.matmul %81, %80, %cst_38 {dimension_numbers = #tpu.dot_dimension_numbers<[1], [0], [0], [1], [0, 0, 1, 1], [], []>} : vector<8x128xbf16>, vector<128x256xbf16>, vector<8x256xf32> -> vector<8x256xf32>
    %c1_39 = arith.constant 1 : index
    %c0_40 = arith.constant 0 : index
    %c0_41 = arith.constant 0 : index
    %83 = vector.load %arg2[%c1_39, %c0_40, %c0_41] : memref<3x1x256xf32, #tpu.memory_space<vmem>>, vector<1x1x256xf32>
    %84 = vector.shape_cast %83 : vector<1x1x256xf32> to vector<1x256xf32>
    %85 = vector.broadcast %84 : vector<1x256xf32> to vector<8x256xf32>
    %86 = arith.addf %82, %85 : vector<8x256xf32>
    %87 = vector.extract_strided_slice %86 {offsets = [0, 0], sizes = [8, 128], strides = [1, 1]} : vector<8x256xf32> to vector<8x128xf32>
    %88 = vector.extract_strided_slice %86 {offsets = [0, 128], sizes = [8, 128], strides = [1, 1]} : vector<8x256xf32> to vector<8x128xf32>
    %c1_42 = arith.constant 1 : index
    %c0_43 = arith.constant 0 : index
    %c0_44 = arith.constant 0 : index
    %c0_45 = arith.constant 0 : index
    %89 = vector.load %arg3[%c1_42, %c0_43, %c0_44, %c0_45] : memref<3x1x128x256xbf16, #tpu.memory_space<vmem>>, vector<1x1x128x256xbf16>
    %90 = vector.shape_cast %89 : vector<1x1x128x256xbf16> to vector<128x256xbf16>
    %91 = arith.truncf %78 : vector<8x128xf32> to vector<8x128xbf16>
    %cst_46 = arith.constant dense<0.000000e+00> : vector<8x256xf32>
    %92 = tpu.matmul %91, %90, %cst_46 {dimension_numbers = #tpu.dot_dimension_numbers<[1], [0], [0], [1], [0, 0, 1, 1], [], []>} : vector<8x128xbf16>, vector<128x256xbf16>, vector<8x256xf32> -> vector<8x256xf32>
    %c1_47 = arith.constant 1 : index
    %c0_48 = arith.constant 0 : index
    %c0_49 = arith.constant 0 : index
    %c0_50 = arith.constant 0 : index
    %93 = vector.load %arg4[%c1_47, %c0_48, %c0_49, %c0_50] : memref<3x1x1x256xf32, #tpu.memory_space<vmem>>, vector<1x1x1x256xf32>
    %94 = vector.shape_cast %93 : vector<1x1x1x256xf32> to vector<1x256xf32>
    %95 = vector.broadcast %94 : vector<1x256xf32> to vector<8x256xf32>
    %96 = arith.addf %92, %95 : vector<8x256xf32>
    %97 = vector.extract_strided_slice %96 {offsets = [0, 0], sizes = [8, 128], strides = [1, 1]} : vector<8x256xf32> to vector<8x128xf32>
    %98 = arith.mulf %87, %97 : vector<8x128xf32>
    %cst_51 = arith.constant dense<0.000000e+00> : vector<8xf32>
    %99 = vector.multi_reduction <add>, %98, %cst_51 [1] : vector<8x128xf32> to vector<8xf32>
    %100 = vector.shape_cast %99 : vector<8xf32> to vector<8x1xf32>
    %101 = vector.extract_strided_slice %96 {offsets = [0, 128], sizes = [8, 128], strides = [1, 1]} : vector<8x256xf32> to vector<8x128xf32>
    %102 = arith.mulf %87, %88 : vector<8x128xf32>
    %cst_52 = arith.constant dense<0.000000e+00> : vector<8xf32>
    %103 = vector.multi_reduction <add>, %102, %cst_52 [1] : vector<8x128xf32> to vector<8xf32>
    %104 = vector.shape_cast %103 : vector<8xf32> to vector<8x1xf32>
    %105 = arith.maximumf %100, %104 : vector<8x1xf32>
    %106 = arith.subf %100, %105 : vector<8x1xf32>
    %107 = math.exp %106 : vector<8x1xf32>
    %108 = arith.subf %104, %105 : vector<8x1xf32>
    %109 = math.exp %108 : vector<8x1xf32>
    %110 = arith.addf %107, %109 : vector<8x1xf32>
    %cst_53 = arith.constant 1.000000e+00 : f32
    %111 = vector.broadcast %cst_53 : f32 to vector<8x1xf32>
    %112 = arith.divf %111, %110 : vector<8x1xf32>
    %113 = arith.mulf %107, %112 : vector<8x1xf32>
    %114 = arith.mulf %109, %112 : vector<8x1xf32>
    %115 = vector.broadcast %113 : vector<8x1xf32> to vector<8x128xf32>
    %116 = arith.mulf %115, %78 : vector<8x128xf32>
    %117 = vector.broadcast %114 : vector<8x1xf32> to vector<8x128xf32>
    %118 = arith.mulf %117, %69 : vector<8x128xf32>
    %119 = arith.addf %116, %118 : vector<8x128xf32>
    %120 = arith.mulf %119, %119 : vector<8x128xf32>
    %cst_54 = arith.constant dense<0.000000e+00> : vector<8xf32>
    %121 = vector.multi_reduction <add>, %120, %cst_54 [1] : vector<8x128xf32> to vector<8xf32>
    %122 = vector.shape_cast %121 : vector<8xf32> to vector<8x1xf32>
    %123 = math.sqrt %122 : vector<8x1xf32>
    %cst_55 = arith.constant 9.99999996E-13 : f32
    %124 = vector.broadcast %cst_55 : f32 to vector<8x1xf32>
    %125 = arith.maximumf %123, %124 : vector<8x1xf32>
    %126 = vector.broadcast %125 : vector<8x1xf32> to vector<8x128xf32>
    %127 = arith.divf %119, %126 : vector<8x128xf32>
    %c1_56 = arith.constant 1 : index
    %c0_57 = arith.constant 0 : index
    %c0_58 = arith.constant 0 : index
    %128 = vector.load %arg5[%c1_56, %c0_57, %c0_58] : memref<3x128x128xbf16, #tpu.memory_space<vmem>>, vector<1x128x128xbf16>
    %129 = vector.shape_cast %128 : vector<1x128x128xbf16> to vector<128x128xbf16>
    %130 = arith.truncf %127 : vector<8x128xf32> to vector<8x128xbf16>
    %cst_59 = arith.constant dense<0.000000e+00> : vector<8x128xf32>
    %131 = tpu.matmul %130, %129, %cst_59 {dimension_numbers = #tpu.dot_dimension_numbers<[1], [0], [0], [1], [0, 0, 1, 1], [], []>} : vector<8x128xbf16>, vector<128x128xbf16>, vector<8x128xf32> -> vector<8x128xf32>
    %c1_60 = arith.constant 1 : index
    %c0_61 = arith.constant 0 : index
    %c0_62 = arith.constant 0 : index
    %132 = vector.load %arg6[%c1_60, %c0_61, %c0_62] : memref<3x1x128xf32, #tpu.memory_space<vmem>>, vector<1x1x128xf32>
    %133 = vector.shape_cast %132 : vector<1x1x128xf32> to vector<1x128xf32>
    %134 = vector.broadcast %133 : vector<1x128xf32> to vector<8x128xf32>
    %135 = arith.addf %131, %134 : vector<8x128xf32>
    %136 = arith.addf %135, %69 : vector<8x128xf32>
    %137 = arith.mulf %136, %136 : vector<8x128xf32>
    %cst_63 = arith.constant dense<0.000000e+00> : vector<8xf32>
    %138 = vector.multi_reduction <add>, %137, %cst_63 [1] : vector<8x128xf32> to vector<8xf32>
    %139 = vector.shape_cast %138 : vector<8xf32> to vector<8x1xf32>
    %140 = math.sqrt %139 : vector<8x1xf32>
    %cst_64 = arith.constant 9.99999996E-13 : f32
    %141 = vector.broadcast %cst_64 : f32 to vector<8x1xf32>
    %142 = arith.maximumf %140, %141 : vector<8x1xf32>
    %143 = vector.broadcast %142 : vector<8x1xf32> to vector<8x128xf32>
    %144 = arith.divf %136, %143 : vector<8x128xf32>
    %145 = arith.addf %101, %78 : vector<8x128xf32>
    %146 = arith.mulf %145, %145 : vector<8x128xf32>
    %cst_65 = arith.constant dense<0.000000e+00> : vector<8xf32>
    %147 = vector.multi_reduction <add>, %146, %cst_65 [1] : vector<8x128xf32> to vector<8xf32>
    %148 = vector.shape_cast %147 : vector<8xf32> to vector<8x1xf32>
    %149 = math.sqrt %148 : vector<8x1xf32>
    %cst_66 = arith.constant 9.99999996E-13 : f32
    %150 = vector.broadcast %cst_66 : f32 to vector<8x1xf32>
    %151 = arith.maximumf %149, %150 : vector<8x1xf32>
    %152 = vector.broadcast %151 : vector<8x1xf32> to vector<8x128xf32>
    %153 = arith.divf %145, %152 : vector<8x128xf32>
    %c2 = arith.constant 2 : index
    %c0_67 = arith.constant 0 : index
    %c0_68 = arith.constant 0 : index
    %154 = vector.load %arg1[%c2, %c0_67, %c0_68] : memref<3x128x256xbf16, #tpu.memory_space<vmem>>, vector<1x128x256xbf16>
    %155 = vector.shape_cast %154 : vector<1x128x256xbf16> to vector<128x256xbf16>
    %156 = arith.truncf %144 : vector<8x128xf32> to vector<8x128xbf16>
    %cst_69 = arith.constant dense<0.000000e+00> : vector<8x256xf32>
    %157 = tpu.matmul %156, %155, %cst_69 {dimension_numbers = #tpu.dot_dimension_numbers<[1], [0], [0], [1], [0, 0, 1, 1], [], []>} : vector<8x128xbf16>, vector<128x256xbf16>, vector<8x256xf32> -> vector<8x256xf32>
    %c2_70 = arith.constant 2 : index
    %c0_71 = arith.constant 0 : index
    %c0_72 = arith.constant 0 : index
    %158 = vector.load %arg2[%c2_70, %c0_71, %c0_72] : memref<3x1x256xf32, #tpu.memory_space<vmem>>, vector<1x1x256xf32>
    %159 = vector.shape_cast %158 : vector<1x1x256xf32> to vector<1x256xf32>
    %160 = vector.broadcast %159 : vector<1x256xf32> to vector<8x256xf32>
    %161 = arith.addf %157, %160 : vector<8x256xf32>
    %162 = vector.extract_strided_slice %161 {offsets = [0, 0], sizes = [8, 128], strides = [1, 1]} : vector<8x256xf32> to vector<8x128xf32>
    %163 = vector.extract_strided_slice %161 {offsets = [0, 128], sizes = [8, 128], strides = [1, 1]} : vector<8x256xf32> to vector<8x128xf32>
    %c2_73 = arith.constant 2 : index
    %c0_74 = arith.constant 0 : index
    %c0_75 = arith.constant 0 : index
    %c0_76 = arith.constant 0 : index
    %164 = vector.load %arg3[%c2_73, %c0_74, %c0_75, %c0_76] : memref<3x1x128x256xbf16, #tpu.memory_space<vmem>>, vector<1x1x128x256xbf16>
    %165 = vector.shape_cast %164 : vector<1x1x128x256xbf16> to vector<128x256xbf16>
    %166 = arith.truncf %153 : vector<8x128xf32> to vector<8x128xbf16>
    %cst_77 = arith.constant dense<0.000000e+00> : vector<8x256xf32>
    %167 = tpu.matmul %166, %165, %cst_77 {dimension_numbers = #tpu.dot_dimension_numbers<[1], [0], [0], [1], [0, 0, 1, 1], [], []>} : vector<8x128xbf16>, vector<128x256xbf16>, vector<8x256xf32> -> vector<8x256xf32>
    %c2_78 = arith.constant 2 : index
    %c0_79 = arith.constant 0 : index
    %c0_80 = arith.constant 0 : index
    %c0_81 = arith.constant 0 : index
    %168 = vector.load %arg4[%c2_78, %c0_79, %c0_80, %c0_81] : memref<3x1x1x256xf32, #tpu.memory_space<vmem>>, vector<1x1x1x256xf32>
    %169 = vector.shape_cast %168 : vector<1x1x1x256xf32> to vector<1x256xf32>
    %170 = vector.broadcast %169 : vector<1x256xf32> to vector<8x256xf32>
    %171 = arith.addf %167, %170 : vector<8x256xf32>
    %172 = vector.extract_strided_slice %171 {offsets = [0, 0], sizes = [8, 128], strides = [1, 1]} : vector<8x256xf32> to vector<8x128xf32>
    %173 = arith.mulf %162, %172 : vector<8x128xf32>
    %cst_82 = arith.constant dense<0.000000e+00> : vector<8xf32>
    %174 = vector.multi_reduction <add>, %173, %cst_82 [1] : vector<8x128xf32> to vector<8xf32>
    %175 = vector.shape_cast %174 : vector<8xf32> to vector<8x1xf32>
    %176 = vector.extract_strided_slice %171 {offsets = [0, 128], sizes = [8, 128], strides = [1, 1]} : vector<8x256xf32> to vector<8x128xf32>
    %177 = arith.mulf %162, %163 : vector<8x128xf32>
    %cst_83 = arith.constant dense<0.000000e+00> : vector<8xf32>
    %178 = vector.multi_reduction <add>, %177, %cst_83 [1] : vector<8x128xf32> to vector<8xf32>
    %179 = vector.shape_cast %178 : vector<8xf32> to vector<8x1xf32>
    %180 = arith.maximumf %175, %179 : vector<8x1xf32>
    %181 = arith.subf %175, %180 : vector<8x1xf32>
    %182 = math.exp %181 : vector<8x1xf32>
    %183 = arith.subf %179, %180 : vector<8x1xf32>
    %184 = math.exp %183 : vector<8x1xf32>
    %185 = arith.addf %182, %184 : vector<8x1xf32>
    %cst_84 = arith.constant 1.000000e+00 : f32
    %186 = vector.broadcast %cst_84 : f32 to vector<8x1xf32>
    %187 = arith.divf %186, %185 : vector<8x1xf32>
    %188 = arith.mulf %182, %187 : vector<8x1xf32>
    %189 = arith.mulf %184, %187 : vector<8x1xf32>
    %190 = vector.broadcast %188 : vector<8x1xf32> to vector<8x128xf32>
    %191 = arith.mulf %190, %153 : vector<8x128xf32>
    %192 = vector.broadcast %189 : vector<8x1xf32> to vector<8x128xf32>
    %193 = arith.mulf %192, %144 : vector<8x128xf32>
    %194 = arith.addf %191, %193 : vector<8x128xf32>
    %195 = arith.mulf %194, %194 : vector<8x128xf32>
    %cst_85 = arith.constant dense<0.000000e+00> : vector<8xf32>
    %196 = vector.multi_reduction <add>, %195, %cst_85 [1] : vector<8x128xf32> to vector<8xf32>
    %197 = vector.shape_cast %196 : vector<8xf32> to vector<8x1xf32>
    %198 = math.sqrt %197 : vector<8x1xf32>
    %cst_86 = arith.constant 9.99999996E-13 : f32
    %199 = vector.broadcast %cst_86 : f32 to vector<8x1xf32>
    %200 = arith.maximumf %198, %199 : vector<8x1xf32>
    %201 = vector.broadcast %200 : vector<8x1xf32> to vector<8x128xf32>
    %202 = arith.divf %194, %201 : vector<8x128xf32>
    %c2_87 = arith.constant 2 : index
    %c0_88 = arith.constant 0 : index
    %c0_89 = arith.constant 0 : index
    %203 = vector.load %arg5[%c2_87, %c0_88, %c0_89] : memref<3x128x128xbf16, #tpu.memory_space<vmem>>, vector<1x128x128xbf16>
    %204 = vector.shape_cast %203 : vector<1x128x128xbf16> to vector<128x128xbf16>
    %205 = arith.truncf %202 : vector<8x128xf32> to vector<8x128xbf16>
    %cst_90 = arith.constant dense<0.000000e+00> : vector<8x128xf32>
    %206 = tpu.matmul %205, %204, %cst_90 {dimension_numbers = #tpu.dot_dimension_numbers<[1], [0], [0], [1], [0, 0, 1, 1], [], []>} : vector<8x128xbf16>, vector<128x128xbf16>, vector<8x128xf32> -> vector<8x128xf32>
    %c2_91 = arith.constant 2 : index
    %c0_92 = arith.constant 0 : index
    %c0_93 = arith.constant 0 : index
    %207 = vector.load %arg6[%c2_91, %c0_92, %c0_93] : memref<3x1x128xf32, #tpu.memory_space<vmem>>, vector<1x1x128xf32>
    %208 = vector.shape_cast %207 : vector<1x1x128xf32> to vector<1x128xf32>
    %209 = vector.broadcast %208 : vector<1x128xf32> to vector<8x128xf32>
    %210 = arith.addf %206, %209 : vector<8x128xf32>
    %211 = arith.addf %210, %144 : vector<8x128xf32>
    %212 = arith.mulf %211, %211 : vector<8x128xf32>
    %cst_94 = arith.constant dense<0.000000e+00> : vector<8xf32>
    %213 = vector.multi_reduction <add>, %212, %cst_94 [1] : vector<8x128xf32> to vector<8xf32>
    %214 = vector.shape_cast %213 : vector<8xf32> to vector<8x1xf32>
    %215 = math.sqrt %214 : vector<8x1xf32>
    %cst_95 = arith.constant 9.99999996E-13 : f32
    %216 = vector.broadcast %cst_95 : f32 to vector<8x1xf32>
    %217 = arith.maximumf %215, %216 : vector<8x1xf32>
    %218 = vector.broadcast %217 : vector<8x1xf32> to vector<8x128xf32>
    %219 = arith.divf %211, %218 : vector<8x128xf32>
    %220 = arith.addf %176, %153 : vector<8x128xf32>
    %221 = arith.mulf %220, %220 : vector<8x128xf32>
    %cst_96 = arith.constant dense<0.000000e+00> : vector<8xf32>
    %222 = vector.multi_reduction <add>, %221, %cst_96 [1] : vector<8x128xf32> to vector<8xf32>
    %223 = vector.shape_cast %222 : vector<8xf32> to vector<8x1xf32>
    %224 = math.sqrt %223 : vector<8x1xf32>
    %cst_97 = arith.constant 9.99999996E-13 : f32
    %225 = vector.broadcast %cst_97 : f32 to vector<8x1xf32>
    %226 = arith.maximumf %224, %225 : vector<8x1xf32>
    %227 = vector.broadcast %226 : vector<8x1xf32> to vector<8x128xf32>
    %228 = arith.divf %220, %227 : vector<8x128xf32>
    %c0_98 = arith.constant 0 : index
    %c0_99 = arith.constant 0 : index
    %229 = vector.load %arg7[%c0_98, %c0_99] : memref<128x256xbf16, #tpu.memory_space<vmem>>, vector<128x256xbf16>
    %230 = arith.truncf %219 : vector<8x128xf32> to vector<8x128xbf16>
    %cst_100 = arith.constant dense<0.000000e+00> : vector<8x256xf32>
    %231 = tpu.matmul %230, %229, %cst_100 {dimension_numbers = #tpu.dot_dimension_numbers<[1], [0], [0], [1], [0, 0, 1, 1], [], []>} : vector<8x128xbf16>, vector<128x256xbf16>, vector<8x256xf32> -> vector<8x256xf32>
    %c0_101 = arith.constant 0 : index
    %c0_102 = arith.constant 0 : index
    %232 = vector.load %arg8[%c0_101, %c0_102] : memref<1x256xf32, #tpu.memory_space<vmem>>, vector<1x256xf32>
    %233 = vector.broadcast %232 : vector<1x256xf32> to vector<8x256xf32>
    %234 = arith.addf %231, %233 : vector<8x256xf32>
    %235 = vector.extract_strided_slice %234 {offsets = [0, 0], sizes = [8, 128], strides = [1, 1]} : vector<8x256xf32> to vector<8x128xf32>
    %236 = vector.extract_strided_slice %234 {offsets = [0, 128], sizes = [8, 128], strides = [1, 1]} : vector<8x256xf32> to vector<8x128xf32>
    %c0_103 = arith.constant 0 : index
    %c0_104 = arith.constant 0 : index
    %c0_105 = arith.constant 0 : index
    %237 = vector.load %arg9[%c0_103, %c0_104, %c0_105] : memref<1x128x128xbf16, #tpu.memory_space<vmem>>, vector<1x128x128xbf16>
    %238 = vector.shape_cast %237 : vector<1x128x128xbf16> to vector<128x128xbf16>
    %239 = arith.truncf %228 : vector<8x128xf32> to vector<8x128xbf16>
    %cst_106 = arith.constant dense<0.000000e+00> : vector<8x128xf32>
    %240 = tpu.matmul %239, %238, %cst_106 {dimension_numbers = #tpu.dot_dimension_numbers<[1], [0], [0], [1], [0, 0, 1, 1], [], []>} : vector<8x128xbf16>, vector<128x128xbf16>, vector<8x128xf32> -> vector<8x128xf32>
    %c0_107 = arith.constant 0 : index
    %c0_108 = arith.constant 0 : index
    %c0_109 = arith.constant 0 : index
    %241 = vector.load %arg10[%c0_107, %c0_108, %c0_109] : memref<1x1x128xf32, #tpu.memory_space<vmem>>, vector<1x1x128xf32>
    %242 = vector.shape_cast %241 : vector<1x1x128xf32> to vector<1x128xf32>
    %243 = vector.broadcast %242 : vector<1x128xf32> to vector<8x128xf32>
    %244 = arith.addf %240, %243 : vector<8x128xf32>
    %245 = arith.mulf %235, %244 : vector<8x128xf32>
    %cst_110 = arith.constant dense<0.000000e+00> : vector<8xf32>
    %246 = vector.multi_reduction <add>, %245, %cst_110 [1] : vector<8x128xf32> to vector<8xf32>
    %247 = vector.shape_cast %246 : vector<8xf32> to vector<8x1xf32>
    %248 = arith.mulf %235, %236 : vector<8x128xf32>
    %cst_111 = arith.constant dense<0.000000e+00> : vector<8xf32>
    %249 = vector.multi_reduction <add>, %248, %cst_111 [1] : vector<8x128xf32> to vector<8xf32>
    %250 = vector.shape_cast %249 : vector<8xf32> to vector<8x1xf32>
    %251 = arith.maximumf %247, %250 : vector<8x1xf32>
    %252 = arith.subf %247, %251 : vector<8x1xf32>
    %253 = math.exp %252 : vector<8x1xf32>
    %254 = arith.subf %250, %251 : vector<8x1xf32>
    %255 = math.exp %254 : vector<8x1xf32>
    %256 = arith.addf %253, %255 : vector<8x1xf32>
    %cst_112 = arith.constant 1.000000e+00 : f32
    %257 = vector.broadcast %cst_112 : f32 to vector<8x1xf32>
    %258 = arith.divf %257, %256 : vector<8x1xf32>
    %259 = arith.mulf %253, %258 : vector<8x1xf32>
    %260 = arith.mulf %255, %258 : vector<8x1xf32>
    %261 = vector.broadcast %259 : vector<8x1xf32> to vector<8x128xf32>
    %262 = arith.mulf %261, %228 : vector<8x128xf32>
    %263 = vector.broadcast %260 : vector<8x1xf32> to vector<8x128xf32>
    %264 = arith.mulf %263, %219 : vector<8x128xf32>
    %265 = arith.addf %262, %264 : vector<8x128xf32>
    %266 = arith.addf %265, %219 : vector<8x128xf32>
    %267 = arith.mulf %266, %266 : vector<8x128xf32>
    %cst_113 = arith.constant dense<0.000000e+00> : vector<8xf32>
    %268 = vector.multi_reduction <add>, %267, %cst_113 [1] : vector<8x128xf32> to vector<8xf32>
    %269 = vector.shape_cast %268 : vector<8xf32> to vector<8x1xf32>
    %270 = math.sqrt %269 : vector<8x1xf32>
    %cst_114 = arith.constant 9.99999996E-13 : f32
    %271 = vector.broadcast %cst_114 : f32 to vector<8x1xf32>
    %272 = arith.maximumf %270, %271 : vector<8x1xf32>
    %273 = vector.broadcast %272 : vector<8x1xf32> to vector<8x128xf32>
    %274 = arith.divf %266, %273 : vector<8x128xf32>
    %c0_115 = arith.constant 0 : index
    %c0_116 = arith.constant 0 : index
    %275 = vector.load %arg11[%c0_115, %c0_116] : memref<8x128xf32, #tpu.memory_space<vmem>>, vector<8x128xf32>
    tpu.vector_store %arg11[%c0_115, %c0_116], %274 {strides = array<i32>} : memref<8x128xf32, #tpu.memory_space<vmem>>, vector<8x128xf32>,
    return
  }
}

</mosaic_0001>

<llo_original>
// kernel: positional_transformer.1
$region0: #{positional_transformer.1}
  #allocation0 [shape = 'u32[]', space=smem, size = 0x4, offset = 0x4, fixed_abs, tag = 'smem constant byte address 0x4 - core index']
  #allocation1 [shape = 'u32[72,128]{1,0:T(1,128)}', space=vmem, size = 0x9000, scoped, tag = 'internal scratch']
  %s0 = inlined_call_operand.vmem [shape: f32[2,8,128], index: 0, kind: input, shape index: {}]
  %s1 = inlined_call_operand.vmem [shape: bf16[3,128,256], index: 1, kind: input, shape index: {}]
  %s2 = inlined_call_operand.vmem [shape: f32[3,1,256], index: 2, kind: input, shape index: {}]
  %s3 = inlined_call_operand.vmem [shape: bf16[3,1,128,256], index: 3, kind: input, shape index: {}]
  %s4 = inlined_call_operand.vmem [shape: f32[3,1,1,256], index: 4, kind: input, shape index: {}]
  %s5 = inlined_call_operand.vmem [shape: bf16[3,128,128], index: 5, kind: input, shape index: {}]
  %s6 = inlined_call_operand.vmem [shape: f32[3,1,128], index: 6, kind: input, shape index: {}]
  %s7 = inlined_call_operand.vmem [shape: bf16[128,256], index: 7, kind: input, shape index: {}]
  %s8 = inlined_call_operand.vmem [shape: f32[1,256], index: 8, kind: input, shape index: {}]
  %s9 = inlined_call_operand.vmem [shape: bf16[1,128,128], index: 9, kind: input, shape index: {}]
  %s10 = inlined_call_operand.vmem [shape: f32[1,1,128], index: 10, kind: input, shape index: {}]
  %s11 = inlined_call_operand.hbm [shape: f32[8,128], index: 11, kind: output, shape index: {}]
  %s12 = sld [smem:[#allocation0]]
  $region54: #{positional_transformer.1} parent=0
    _
  %s14 = ssub.s32 1, %s12
  %s15 = scalar_select 0, %s14, %s12
  $region1: #{positional_transformer.1} parent=0
    #allocation2 [shape = 'u8[4096]{0}', space=vmem, size = 0x1000, scoped, tag = 'output window, operand 0, single buffered']
    #allocation3 [shape = 's32[1]{0}', space=sflag, size = 0x4, scoped, tag = 'scoped memory for positional_transformer.1']
    %16 = vsyncpa [#allocation3], 0
    // Predicated region
    $region2: #{positional_transformer.1} parent=1 // pred_check
      _
    $region3: #{positional_transformer.1} parent=1 // pred_check_branch
      %18 = sbr.rel (0) target = $region5
    $region4: #{positional_transformer.1} parent=1 // pred_region
      _
    $region5: #{positional_transformer.1} parent=1 // pred_fallthru
      _
    // Predicated region
    $region6: #{positional_transformer.1} parent=1 // pred_check
      _
    $region7: #{positional_transformer.1} parent=1 // pred_check_branch
      %20 = sbr.rel (0) target = $region9
    $region8: #{positional_transformer.1} parent=1 // pred_region
      _
    $region9: #{positional_transformer.1} parent=1 // pred_fallthru
      _
    // Predicated region
    $region10: #{positional_transformer.1} parent=1 // pred_check
      _
    $region11: #{positional_transformer.1} parent=1 // pred_check_branch
      %22 = sbr.rel (0) target = $region13
    $region12: #{positional_transformer.1} parent=1 // pred_region
      _
    $region13: #{positional_transformer.1} parent=1 // pred_fallthru
      _
    // Predicated region
    $region14: #{positional_transformer.1} parent=1 // pred_check
      _
    $region15: #{positional_transformer.1} parent=1 // pred_check_branch
      %24 = sbr.rel (0) target = $region17
    $region16: #{positional_transformer.1} parent=1 // pred_region
      _
    $region17: #{positional_transformer.1} parent=1 // pred_fallthru
      _
    // Predicated region
    $region18: #{positional_transformer.1} parent=1 // pred_check
      _
    $region19: #{positional_transformer.1} parent=1 // pred_check_branch
      %26 = sbr.rel (0) target = $region21
    $region20: #{positional_transformer.1} parent=1 // pred_region
      _
    $region21: #{positional_transformer.1} parent=1 // pred_fallthru
      _
    // Predicated region
    $region22: #{positional_transformer.1} parent=1 // pred_check
      _
    $region23: #{positional_transformer.1} parent=1 // pred_check_branch
      %28 = sbr.rel (0) target = $region25
    $region24: #{positional_transformer.1} parent=1 // pred_region
      _
    $region25: #{positional_transformer.1} parent=1 // pred_fallthru
      _
    // Predicated region
    $region26: #{positional_transformer.1} parent=1 // pred_check
      _
    $region27: #{positional_transformer.1} parent=1 // pred_check_branch
      %30 = sbr.rel (0) target = $region29
    $region28: #{positional_transformer.1} parent=1 // pred_region
      _
    $region29: #{positional_transformer.1} parent=1 // pred_fallthru
      _
    // Predicated region
    $region30: #{positional_transformer.1} parent=1 // pred_check
      _
    $region31: #{positional_transformer.1} parent=1 // pred_check_branch
      %32 = sbr.rel (0) target = $region33
    $region32: #{positional_transformer.1} parent=1 // pred_region
      _
    $region33: #{positional_transformer.1} parent=1 // pred_fallthru
      _
    // Predicated region
    $region34: #{positional_transformer.1} parent=1 // pred_check
      _
    $region35: #{positional_transformer.1} parent=1 // pred_check_branch
      %34 = sbr.rel (0) target = $region37
    $region36: #{positional_transformer.1} parent=1 // pred_region
      _
    $region37: #{positional_transformer.1} parent=1 // pred_fallthru
      _
    // Predicated region
    $region38: #{positional_transformer.1} parent=1 // pred_check
      _
    $region39: #{positional_transformer.1} parent=1 // pred_check_branch
      %36 = sbr.rel (0) target = $region41
    $region40: #{positional_transformer.1} parent=1 // pred_region
      _
    $region41: #{positional_transformer.1} parent=1 // pred_fallthru
      _
    // Predicated region
    $region42: #{positional_transformer.1} parent=1 // pred_check
      _
    $region43: #{positional_transformer.1} parent=1 // pred_check_branch
      %38 = sbr.rel (0) target = $region45
    $region44: #{positional_transformer.1} parent=1 // pred_region
      _
    $region45: #{positional_transformer.1} parent=1 // pred_fallthru
      _
    %v39 = vld [vmem:[%s0] sm:$0xff]
    %s40 = scalar_lea.vmem %s0, 8
    %v41 = vld [vmem:[%s40] sm:$0xff]
    %v42 = vld [vmem:[%s1] sm:$0xff]
    %v43 = vld [vmem:[%s1 + $0x8] sm:$0xff]
    %v44 = vld [vmem:[%s1 + $0x10] sm:$0xff]
    %v45 = vld [vmem:[%s1 + $0x18] sm:$0xff]
    %v46 = vld [vmem:[%s1 + $0x20] sm:$0xff]
    %v47 = vld [vmem:[%s1 + $0x28] sm:$0xff]
    %v48 = vld [vmem:[%s1 + $0x30] sm:$0xff]
    %v49 = vld [vmem:[%s1 + $0x38] sm:$0xff]
    %v50 = vld [vmem:[%s1 + $0x40] sm:$0xff]
    %v51 = vld [vmem:[%s1 + $0x48] sm:$0xff]
    %v52 = vld [vmem:[%s1 + $0x50] sm:$0xff]
    %v53 = vld [vmem:[%s1 + $0x58] sm:$0xff]
    %v54 = vld [vmem:[%s1 + $0x60] sm:$0xff]
    %v55 = vld [vmem:[%s1 + $0x68] sm:$0xff]
    %v56 = vld [vmem:[%s1 + $0x70] sm:$0xff]
    %v57 = vld [vmem:[%s1 + $0x78] sm:$0xff]
    %v58 = vpack.c.bf16 %v41, %v41
    %v59 = vld [vmem:[%s2] sm:$0x3]
    %v61 = vperm.slane %v59, 0
    %v62 = vperm.slane %v59, 1
    %v81 = vunpack.c.l.b16 %v42
    %v82 = vunpack.c.h.b16 %v42
    %v83 = vunpack.c.l.b16 %v43
    %v84 = vunpack.c.h.b16 %v43
    %v85 = vunpack.c.l.b16 %v44
    %v86 = vunpack.c.h.b16 %v44
    %v87 = vunpack.c.l.b16 %v45
    %v88 = vunpack.c.h.b16 %v45
    %v89 = vunpack.c.l.b16 %v46
    %v90 = vunpack.c.h.b16 %v46
    %v91 = vunpack.c.l.b16 %v47
    %v92 = vunpack.c.h.b16 %v47
    %v93 = vunpack.c.l.b16 %v48
    %v94 = vunpack.c.h.b16 %v48
    %v95 = vunpack.c.l.b16 %v49
    %v96 = vunpack.c.h.b16 %v49
    %v97 = vunpack.c.l.b16 %v50
    %v98 = vunpack.c.h.b16 %v50
    %v99 = vunpack.c.l.b16 %v51
    %v100 = vunpack.c.h.b16 %v51
    %v101 = vunpack.c.l.b16 %v52
    %v102 = vunpack.c.h.b16 %v52
    %v103 = vunpack.c.l.b16 %v53
    %v104 = vunpack.c.h.b16 %v53
    %v105 = vunpack.c.l.b16 %v54
    %v106 = vunpack.c.h.b16 %v54
    %v107 = vunpack.c.l.b16 %v55
    %v108 = vunpack.c.h.b16 %v55
    %v109 = vunpack.c.l.b16 %v56
    %v110 = vunpack.c.h.b16 %v56
    %v111 = vunpack.c.l.b16 %v57
    %v112 = vunpack.c.h.b16 %v57
    %v113 = vpack.c.b16 %v83, %v81
    %v114 = vpack.c.b16 %v84, %v82
    %v115 = vpack.c.b16 %v87, %v85
    %v116 = vpack.c.b16 %v88, %v86
    %v117 = vpack.c.b16 %v91, %v89
    %v118 = vpack.c.b16 %v92, %v90
    %v119 = vpack.c.b16 %v95, %v93
    %v120 = vpack.c.b16 %v96, %v94
    %v121 = vpack.c.b16 %v99, %v97
    %v122 = vpack.c.b16 %v100, %v98
    %v123 = vpack.c.b16 %v103, %v101
    %v124 = vpack.c.b16 %v104, %v102
    %v125 = vpack.c.b16 %v107, %v105
    %v126 = vpack.c.b16 %v108, %v106
    %v127 = vpack.c.b16 %v111, %v109
    %v128 = vpack.c.b16 %v112, %v110
    %145 = vmatpush.bf16.msra.mxu0 %v127
    %146 = vmatpush.bf16.msra.mxu0 %v125
    %147 = vmatpush.bf16.msra.mxu0 %v123
    %148 = vmatpush.bf16.msra.mxu0 %v121
    %149 = vmatpush.bf16.msra.mxu0 %v119
    %150 = vmatpush.bf16.msra.mxu0 %v117
    %151 = vmatpush.bf16.msra.mxu0 %v115
    %152 = vmatpush.bf16.msra.mxu0 %v113
    %153 = vmatmul.bf16.gmra.mxu0 %v58
    %v154 = vpop.f32.mrf.mxu0
    %v155 = vadd.f32 %v61, %v154
    %v156 = vpop.f32.mrf.mxu0
    %157 = vdwg.mxu0
    %158 = vmatpush.bf16.msra.mxu0 %v128
    %159 = vmatpush.bf16.msra.mxu0 %v126
    %160 = vmatpush.bf16.msra.mxu0 %v124
    %161 = vmatpush.bf16.msra.mxu0 %v122
    %162 = vmatpush.bf16.msra.mxu0 %v120
    %163 = vmatpush.bf16.msra.mxu0 %v118
    %164 = vmatpush.bf16.msra.mxu0 %v116
    %165 = vmatpush.bf16.msra.mxu0 %v114
    %166 = vmatmul.bf16.gmra.mxu0 %v58
    %v167 = vpop.f32.mrf.mxu0
    %v168 = vadd.f32 %v62, %v167
    %v169 = vpop.f32.mrf.mxu0
    %170 = vdwg.mxu0
    %v171 = vld [vmem:[%s3] sm:$0xff]
    %v172 = vld [vmem:[%s3 + $0x8] sm:$0xff]
    %v173 = vld [vmem:[%s3 + $0x10] sm:$0xff]
    %v174 = vld [vmem:[%s3 + $0x18] sm:$0xff]
    %v175 = vld [vmem:[%s3 + $0x20] sm:$0xff]
    %v176 = vld [vmem:[%s3 + $0x28] sm:$0xff]
    %v177 = vld [vmem:[%s3 + $0x30] sm:$0xff]
    %v178 = vld [vmem:[%s3 + $0x38] sm:$0xff]
    %v179 = vld [vmem:[%s3 + $0x40] sm:$0xff]
    %v180 = vld [vmem:[%s3 + $0x48] sm:$0xff]
    %v181 = vld [vmem:[%s3 + $0x50] sm:$0xff]
    %v182 = vld [vmem:[%s3 + $0x58] sm:$0xff]
    %v183 = vld [vmem:[%s3 + $0x60] sm:$0xff]
    %v184 = vld [vmem:[%s3 + $0x68] sm:$0xff]
    %v185 = vld [vmem:[%s3 + $0x70] sm:$0xff]
    %v186 = vld [vmem:[%s3 + $0x78] sm:$0xff]
    %v187 = vpack.c.bf16 %v39, %v39
    %v188 = vld [vmem:[%s4] sm:$0x3]
    %v190 = vperm.slane %v188, 0
    %v191 = vperm.slane %v188, 1
    %v210 = vunpack.c.l.b16 %v171
    %v211 = vunpack.c.h.b16 %v171
    %v212 = vunpack.c.l.b16 %v172
    %v213 = vunpack.c.h.b16 %v172
    %v214 = vunpack.c.l.b16 %v173
    %v215 = vunpack.c.h.b16 %v173
    %v216 = vunpack.c.l.b16 %v174
    %v217 = vunpack.c.h.b16 %v174
    %v218 = vunpack.c.l.b16 %v175
    %v219 = vunpack.c.h.b16 %v175
    %v220 = vunpack.c.l.b16 %v176
    %v221 = vunpack.c.h.b16 %v176
    %v222 = vunpack.c.l.b16 %v177
    %v223 = vunpack.c.h.b16 %v177
    %v224 = vunpack.c.l.b16 %v178
    %v225 = vunpack.c.h.b16 %v178
    %v226 = vunpack.c.l.b16 %v179
    %v227 = vunpack.c.h.b16 %v179
    %v228 = vunpack.c.l.b16 %v180
    %v229 = vunpack.c.h.b16 %v180
    %v230 = vunpack.c.l.b16 %v181
    %v231 = vunpack.c.h.b16 %v181
    %v232 = vunpack.c.l.b16 %v182
    %v233 = vunpack.c.h.b16 %v182
    %v234 = vunpack.c.l.b16 %v183
    %v235 = vunpack.c.h.b16 %v183
    %v236 = vunpack.c.l.b16 %v184
    %v237 = vunpack.c.h.b16 %v184
    %v238 = vunpack.c.l.b16 %v185
    %v239 = vunpack.c.h.b16 %v185
    %v240 = vunpack.c.l.b16 %v186
    %v241 = vunpack.c.h.b16 %v186
    %v242 = vpack.c.b16 %v212, %v210
    %v243 = vpack.c.b16 %v213, %v211
    %v244 = vpack.c.b16 %v216, %v214
    %v245 = vpack.c.b16 %v217, %v215
    %v246 = vpack.c.b16 %v220, %v218
    %v247 = vpack.c.b16 %v221, %v219
    %v248 = vpack.c.b16 %v224, %v222
    %v249 = vpack.c.b16 %v225, %v223
    %v250 = vpack.c.b16 %v228, %v226
    %v251 = vpack.c.b16 %v229, %v227
    %v252 = vpack.c.b16 %v232, %v230
    %v253 = vpack.c.b16 %v233, %v231
    %v254 = vpack.c.b16 %v236, %v234
    %v255 = vpack.c.b16 %v237, %v235
    %v256 = vpack.c.b16 %v240, %v238
    %v257 = vpack.c.b16 %v241, %v239
    %274 = vmatpush.bf16.msra.mxu0 %v256
    %275 = vmatpush.bf16.msra.mxu0 %v254
    %276 = vmatpush.bf16.msra.mxu0 %v252
    %277 = vmatpush.bf16.msra.mxu0 %v250
    %278 = vmatpush.bf16.msra.mxu0 %v248
    %279 = vmatpush.bf16.msra.mxu0 %v246
    %280 = vmatpush.bf16.msra.mxu0 %v244
    %281 = vmatpush.bf16.msra.mxu0 %v242
    %282 = vmatmul.bf16.gmra.mxu0 %v187
    %v283 = vpop.f32.mrf.mxu0
    %v284 = vadd.f32 %v190, %v283
    %v285 = vpop.f32.mrf.mxu0
    %286 = vdwg.mxu0
    %287 = vmatpush.bf16.msra.mxu0 %v257
    %288 = vmatpush.bf16.msra.mxu0 %v255
    %289 = vmatpush.bf16.msra.mxu0 %v253
    %290 = vmatpush.bf16.msra.mxu0 %v251
    %291 = vmatpush.bf16.msra.mxu0 %v249
    %292 = vmatpush.bf16.msra.mxu0 %v247
    %293 = vmatpush.bf16.msra.mxu0 %v245
    %294 = vmatpush.bf16.msra.mxu0 %v243
    %295 = vmatmul.bf16.gmra.mxu0 %v187
    %v296 = vpop.f32.mrf.mxu0
    %v297 = vadd.f32 %v191, %v296
    %v298 = vpop.f32.mrf.mxu0
    %299 = vdwg.mxu0
    %v300 = vmul.f32 %v155, %v284
    %301 = vadd.xlane.f32.xlu0 %v300
    %v302 = vpop.xlane.xlu0 %301
    %v303 = vmul.f32 %v155, %v168
    %304 = vadd.xlane.f32.xlu0 %v303
    %v305 = vpop.xlane.xlu0 %304
    %v306 = vmax.f32 %v302, %v305
    %v307 = vsub.f32 %v302, %v306
    %v308 = vmul.f32 %v307, 1.442695
    %v309 = vpow.pop %v308
    %v310 = vsub.f32 %v305, %v306
    %v311 = vmul.f32 %v310, 1.442695
    %v312 = vpow.pop %v311
    %v313 = vadd.f32 %v309, %v312
    %v314 = vrcp.pop %v313
    %v315 = vmul.f32 %v313, %v314
    %v316 = vsub.f32 1.0, %v315
    %v317 = vmul.f32 %v314, %v316
    %v318 = vadd.f32 %v314, %v317
    %vm319 = vweird.f32 %v313
    %vm320 = vweird.f32 %v314
    %vm321 = vmor %vm319, %vm320
    %v322 = vsel %vm321, %v314, %v318
    %v323 = vand.u32 2147483647, %v313
    %vm324 = vcmp.eq.f32.partialorder %v323, 8.507059e+37
    %v325 = vand.u32 %v313, 2147483648
    %v326 = vor.u32 1.1754944e-38, %v325
    %v327 = vsel %vm324, %v326, %v322
    %v328 = vmul.f32 1.0, %v327
    %v329 = vmul.f32 %v309, %v328
    %v330 = vmul.f32 %v312, %v328
    %v331 = vmul.f32 %v329, %v39
    %v332 = vmul.f32 %v330, %v41
    %v333 = vadd.f32 %v331, %v332
    %v334 = vmul.f32 %v333, %v333
    %335 = vadd.xlane.f32.xlu0 %v334
    %v336 = vpop.xlane.xlu0 %335
    %v337 = vrsqrt.pop %v336
    %v338 = vmul.f32 %v337, %v336
    %v339 = vmul.f32 %v338, %v337
    %v340 = vmul.f32 0.5, %v339
    %v341 = vsub.f32 1.5, %v340
    %v342 = vmul.f32 %v337, %v341
    %v343 = vmul.f32 %v336, %v342
    %vm344 = vcmp.eq.f32.partialorder %v336, inf
    %v345 = vsel %vm344, %v336, %v343
    %vm346 = vcmp.eq.f32.partialorder %v336, 0.0
    %v347 = vand.u32 %v336, 2147483648
    %v348 = vsel %vm346, %v347, %v345
    %v349 = vmax.f32 %v348, 1e-12
    %v350 = vrcp.pop %v349
    %v351 = vmul.f32 %v349, %v350
    %v352 = vsub.f32 1.0, %v351
    %v353 = vmul.f32 %v350, %v352
    %v354 = vadd.f32 %v350, %v353
    %vm355 = vweird.f32 %v349
    %vm356 = vweird.f32 %v350
    %vm357 = vmor %vm355, %vm356
    %v358 = vsel %vm357, %v350, %v354
    %v359 = vand.u32 2147483647, %v349
    %vm360 = vcmp.eq.f32.partialorder %v359, 8.507059e+37
    %v361 = vand.u32 %v349, 2147483648
    %v362 = vor.u32 1.1754944e-38, %v361
    %v363 = vsel %vm360, %v362, %v358
    %v364 = vmul.f32 %v333, %v363
    %v365 = vld [vmem:[%s5] sm:$0xf]
    %v366 = vld [vmem:[%s5 + $0x4] sm:$0xf]
    %v367 = vld [vmem:[%s5 + $0x8] sm:$0xf]
    %v368 = vld [vmem:[%s5 + $0xc] sm:$0xf]
    %v369 = vld [vmem:[%s5 + $0x10] sm:$0xf]
    %v370 = vld [vmem:[%s5 + $0x14] sm:$0xf]
    %v371 = vld [vmem:[%s5 + $0x18] sm:$0xf]
    %v372 = vld [vmem:[%s5 + $0x1c] sm:$0xf]
    %v373 = vld [vmem:[%s5 + $0x20] sm:$0xf]
    %v374 = vld [vmem:[%s5 + $0x24] sm:$0xf]
    %v375 = vld [vmem:[%s5 + $0x28] sm:$0xf]
    %v376 = vld [vmem:[%s5 + $0x2c] sm:$0xf]
    %v377 = vld [vmem:[%s5 + $0x30] sm:$0xf]
    %v378 = vld [vmem:[%s5 + $0x34] sm:$0xf]
    %v379 = vld [vmem:[%s5 + $0x38] sm:$0xf]
    %v380 = vld [vmem:[%s5 + $0x3c] sm:$0xf]
    %v381 = vpack.c.bf16 %v364, %v364
    %v382 = vld [vmem:[%s6] sm:$0x1]
    %v384 = vperm.slane %v382, 0
    %v402 = vunpack.c.l.b16 %v365
    %v403 = vunpack.c.l.b16 %v366
    %v404 = vunpack.c.l.b16 %v367
    %v405 = vunpack.c.l.b16 %v368
    %v406 = vunpack.c.l.b16 %v369
    %v407 = vunpack.c.l.b16 %v370
    %v408 = vunpack.c.l.b16 %v371
    %v409 = vunpack.c.l.b16 %v372
    %v410 = vunpack.c.l.b16 %v373
    %v411 = vunpack.c.l.b16 %v374
    %v412 = vunpack.c.l.b16 %v375
    %v413 = vunpack.c.l.b16 %v376
    %v414 = vunpack.c.l.b16 %v377
    %v415 = vunpack.c.l.b16 %v378
    %v416 = vunpack.c.l.b16 %v379
    %v417 = vunpack.c.l.b16 %v380
    %v418 = vpack.c.b16 %v403, %v402
    %v419 = vpack.c.b16 %v405, %v404
    %v420 = vpack.c.b16 %v407, %v406
    %v421 = vpack.c.b16 %v409, %v408
    %v422 = vpack.c.b16 %v411, %v410
    %v423 = vpack.c.b16 %v413, %v412
    %v424 = vpack.c.b16 %v415, %v414
    %v425 = vpack.c.b16 %v417, %v416
    %434 = vmatpush.bf16.msra.mxu0 %v425
    %435 = vmatpush.bf16.msra.mxu0 %v424
    %436 = vmatpush.bf16.msra.mxu0 %v423
    %437 = vmatpush.bf16.msra.mxu0 %v422
    %438 = vmatpush.bf16.msra.mxu0 %v421
    %439 = vmatpush.bf16.msra.mxu0 %v420
    %440 = vmatpush.bf16.msra.mxu0 %v419
    %441 = vmatpush.bf16.msra.mxu0 %v418
    %442 = vmatmul.bf16.gmra.mxu0 %v381
    %v443 = vpop.f32.mrf.mxu0
    %v444 = vadd.f32 %v384, %v443
    %v445 = vpop.f32.mrf.mxu0
    %446 = vdwg.mxu0
    %v447 = vadd.f32 %v444, %v41
    %v448 = vmul.f32 %v447, %v447
    %449 = vadd.xlane.f32.xlu0 %v448
    %v450 = vpop.xlane.xlu0 %449
    %v451 = vrsqrt.pop %v450
    %v452 = vmul.f32 %v451, %v450
    %v453 = vmul.f32 %v452, %v451
    %v454 = vmul.f32 0.5, %v453
    %v455 = vsub.f32 1.5, %v454
    %v456 = vmul.f32 %v451, %v455
    %v457 = vmul.f32 %v450, %v456
    %vm458 = vcmp.eq.f32.partialorder %v450, inf
    %v459 = vsel %vm458, %v450, %v457
    %vm460 = vcmp.eq.f32.partialorder %v450, 0.0
    %v461 = vand.u32 %v450, 2147483648
    %v462 = vsel %vm460, %v461, %v459
    %v463 = vmax.f32 %v462, 1e-12
    %v464 = vrcp.pop %v463
    %v465 = vmul.f32 %v463, %v464
    %v466 = vsub.f32 1.0, %v465
    %v467 = vmul.f32 %v464, %v466
    %v468 = vadd.f32 %v464, %v467
    %vm469 = vweird.f32 %v463
    %vm470 = vweird.f32 %v464
    %vm471 = vmor %vm469, %vm470
    %v472 = vsel %vm471, %v464, %v468
    %v473 = vand.u32 2147483647, %v463
    %vm474 = vcmp.eq.f32.partialorder %v473, 8.507059e+37
    %v475 = vand.u32 %v463, 2147483648
    %v476 = vor.u32 1.1754944e-38, %v475
    %v477 = vsel %vm474, %v476, %v472
    %v478 = vmul.f32 %v447, %v477
    %v479 = vadd.f32 %v297, %v39
    %v480 = vmul.f32 %v479, %v479
    %481 = vadd.xlane.f32.xlu0 %v480
    %v482 = vpop.xlane.xlu0 %481
    %v483 = vrsqrt.pop %v482
    %v484 = vmul.f32 %v483, %v482
    %v485 = vmul.f32 %v484, %v483
    %v486 = vmul.f32 0.5, %v485
    %v487 = vsub.f32 1.5, %v486
    %v488 = vmul.f32 %v483, %v487
    %v489 = vmul.f32 %v482, %v488
    %vm490 = vcmp.eq.f32.partialorder %v482, inf
    %v491 = vsel %vm490, %v482, %v489
    %vm492 = vcmp.eq.f32.partialorder %v482, 0.0
    %v493 = vand.u32 %v482, 2147483648
    %v494 = vsel %vm492, %v493, %v491
    %v495 = vmax.f32 %v494, 1e-12
    %v496 = vrcp.pop %v495
    %v497 = vmul.f32 %v495, %v496
    %v498 = vsub.f32 1.0, %v497
    %v499 = vmul.f32 %v496, %v498
    %v500 = vadd.f32 %v496, %v499
    %vm501 = vweird.f32 %v495
    %vm502 = vweird.f32 %v496
    %vm503 = vmor %vm501, %vm502
    %v504 = vsel %vm503, %v496, %v500
    %v505 = vand.u32 2147483647, %v495
    %vm506 = vcmp.eq.f32.partialorder %v505, 8.507059e+37
    %v507 = vand.u32 %v495, 2147483648
    %v508 = vor.u32 1.1754944e-38, %v507
    %v509 = vsel %vm506, %v508, %v504
    %v510 = vmul.f32 %v479, %v509
    %s511 = scalar_lea.vmem %s1, 128
    %v512 = vld [vmem:[%s511] sm:$0xff]
    %v513 = vld [vmem:[%s511 + $0x8] sm:$0xff]
    %v514 = vld [vmem:[%s511 + $0x10] sm:$0xff]
    %v515 = vld [vmem:[%s511 + $0x18] sm:$0xff]
    %v516 = vld [vmem:[%s511 + $0x20] sm:$0xff]
    %v517 = vld [vmem:[%s511 + $0x28] sm:$0xff]
    %v518 = vld [vmem:[%s511 + $0x30] sm:$0xff]
    %v519 = vld [vmem:[%s511 + $0x38] sm:$0xff]
    %v520 = vld [vmem:[%s511 + $0x40] sm:$0xff]
    %v521 = vld [vmem:[%s511 + $0x48] sm:$0xff]
    %v522 = vld [vmem:[%s511 + $0x50] sm:$0xff]
    %v523 = vld [vmem:[%s511 + $0x58] sm:$0xff]
    %v524 = vld [vmem:[%s511 + $0x60] sm:$0xff]
    %v525 = vld [vmem:[%s511 + $0x68] sm:$0xff]
    %v526 = vld [vmem:[%s511 + $0x70] sm:$0xff]
    %v527 = vld [vmem:[%s511 + $0x78] sm:$0xff]
    %v528 = vpack.c.bf16 %v478, %v478
    %s529 = scalar_lea.vmem %s2, 2
    %v530 = vld [vmem:[%s529] sm:$0x3]
    %v532 = vperm.slane %v530, 0
    %v533 = vperm.slane %v530, 1
    %v552 = vunpack.c.l.b16 %v512
    %v553 = vunpack.c.h.b16 %v512
    %v554 = vunpack.c.l.b16 %v513
    %v555 = vunpack.c.h.b16 %v513
    %v556 = vunpack.c.l.b16 %v514
    %v557 = vunpack.c.h.b16 %v514
    %v558 = vunpack.c.l.b16 %v515
    %v559 = vunpack.c.h.b16 %v515
    %v560 = vunpack.c.l.b16 %v516
    %v561 = vunpack.c.h.b16 %v516
    %v562 = vunpack.c.l.b16 %v517
    %v563 = vunpack.c.h.b16 %v517
    %v564 = vunpack.c.l.b16 %v518
    %v565 = vunpack.c.h.b16 %v518
    %v566 = vunpack.c.l.b16 %v519
    %v567 = vunpack.c.h.b16 %v519
    %v568 = vunpack.c.l.b16 %v520
    %v569 = vunpack.c.h.b16 %v520
    %v570 = vunpack.c.l.b16 %v521
    %v571 = vunpack.c.h.b16 %v521
    %v572 = vunpack.c.l.b16 %v522
    %v573 = vunpack.c.h.b16 %v522
    %v574 = vunpack.c.l.b16 %v523
    %v575 = vunpack.c.h.b16 %v523
    %v576 = vunpack.c.l.b16 %v524
    %v577 = vunpack.c.h.b16 %v524
    %v578 = vunpack.c.l.b16 %v525
    %v579 = vunpack.c.h.b16 %v525
    %v580 = vunpack.c.l.b16 %v526
    %v581 = vunpack.c.h.b16 %v526
    %v582 = vunpack.c.l.b16 %v527
    %v583 = vunpack.c.h.b16 %v527
    %v584 = vpack.c.b16 %v554, %v552
    %v585 = vpack.c.b16 %v555, %v553
    %v586 = vpack.c.b16 %v558, %v556
    %v587 = vpack.c.b16 %v559, %v557
    %v588 = vpack.c.b16 %v562, %v560
    %v589 = vpack.c.b16 %v563, %v561
    %v590 = vpack.c.b16 %v566, %v564
    %v591 = vpack.c.b16 %v567, %v565
    %v592 = vpack.c.b16 %v570, %v568
    %v593 = vpack.c.b16 %v571, %v569
    %v594 = vpack.c.b16 %v574, %v572
    %v595 = vpack.c.b16 %v575, %v573
    %v596 = vpack.c.b16 %v578, %v576
    %v597 = vpack.c.b16 %v579, %v577
    %v598 = vpack.c.b16 %v582, %v580
    %v599 = vpack.c.b16 %v583, %v581
    %616 = vmatpush.bf16.msra.mxu0 %v598
    %617 = vmatpush.bf16.msra.mxu0 %v596
    %618 = vmatpush.bf16.msra.mxu0 %v594
    %619 = vmatpush.bf16.msra.mxu0 %v592
    %620 = vmatpush.bf16.msra.mxu0 %v590
    %621 = vmatpush.bf16.msra.mxu0 %v588
    %622 = vmatpush.bf16.msra.mxu0 %v586
    %623 = vmatpush.bf16.msra.mxu0 %v584
    %624 = vmatmul.bf16.gmra.mxu0 %v528
    %v625 = vpop.f32.mrf.mxu0
    %v626 = vadd.f32 %v532, %v625
    %v627 = vpop.f32.mrf.mxu0
    %628 = vdwg.mxu0
    %629 = vmatpush.bf16.msra.mxu0 %v599
    %630 = vmatpush.bf16.msra.mxu0 %v597
    %631 = vmatpush.bf16.msra.mxu0 %v595
    %632 = vmatpush.bf16.msra.mxu0 %v593
    %633 = vmatpush.bf16.msra.mxu0 %v591
    %634 = vmatpush.bf16.msra.mxu0 %v589
    %635 = vmatpush.bf16.msra.mxu0 %v587
    %636 = vmatpush.bf16.msra.mxu0 %v585
    %637 = vmatmul.bf16.gmra.mxu0 %v528
    %v638 = vpop.f32.mrf.mxu0
    %v639 = vadd.f32 %v533, %v638
    %v640 = vpop.f32.mrf.mxu0
    %641 = vdwg.mxu0
    %s642 = scalar_lea.vmem %s3, 128
    %v643 = vld [vmem:[%s642] sm:$0xff]
    %v644 = vld [vmem:[%s642 + $0x8] sm:$0xff]
    %v645 = vld [vmem:[%s642 + $0x10] sm:$0xff]
    %v646 = vld [vmem:[%s642 + $0x18] sm:$0xff]
    %v647 = vld [vmem:[%s642 + $0x20] sm:$0xff]
    %v648 = vld [vmem:[%s642 + $0x28] sm:$0xff]
    %v649 = vld [vmem:[%s642 + $0x30] sm:$0xff]
    %v650 = vld [vmem:[%s642 + $0x38] sm:$0xff]
    %v651 = vld [vmem:[%s642 + $0x40] sm:$0xff]
    %v652 = vld [vmem:[%s642 + $0x48] sm:$0xff]
    %v653 = vld [vmem:[%s642 + $0x50] sm:$0xff]
    %v654 = vld [vmem:[%s642 + $0x58] sm:$0xff]
    %v655 = vld [vmem:[%s642 + $0x60] sm:$0xff]
    %v656 = vld [vmem:[%s642 + $0x68] sm:$0xff]
    %v657 = vld [vmem:[%s642 + $0x70] sm:$0xff]
    %v658 = vld [vmem:[%s642 + $0x78] sm:$0xff]
    %v659 = vpack.c.bf16 %v510, %v510
    %s660 = scalar_lea.vmem %s4, 2
    %v661 = vld [vmem:[%s660] sm:$0x3]
    %v663 = vperm.slane %v661, 0
    %v664 = vperm.slane %v661, 1
    %v683 = vunpack.c.l.b16 %v643
    %v684 = vunpack.c.h.b16 %v643
    %v685 = vunpack.c.l.b16 %v644
    %v686 = vunpack.c.h.b16 %v644
    %v687 = vunpack.c.l.b16 %v645
    %v688 = vunpack.c.h.b16 %v645
    %v689 = vunpack.c.l.b16 %v646
    %v690 = vunpack.c.h.b16 %v646
    %v691 = vunpack.c.l.b16 %v647
    %v692 = vunpack.c.h.b16 %v647
    %v693 = vunpack.c.l.b16 %v648
    %v694 = vunpack.c.h.b16 %v648
    %v695 = vunpack.c.l.b16 %v649
    %v696 = vunpack.c.h.b16 %v649
    %v697 = vunpack.c.l.b16 %v650
    %v698 = vunpack.c.h.b16 %v650
    %v699 = vunpack.c.l.b16 %v651
    %v700 = vunpack.c.h.b16 %v651
    %v701 = vunpack.c.l.b16 %v652
    %v702 = vunpack.c.h.b16 %v652
    %v703 = vunpack.c.l.b16 %v653
    %v704 = vunpack.c.h.b16 %v653
    %v705 = vunpack.c.l.b16 %v654
    %v706 = vunpack.c.h.b16 %v654
    %v707 = vunpack.c.l.b16 %v655
    %v708 = vunpack.c.h.b16 %v655
    %v709 = vunpack.c.l.b16 %v656
    %v710 = vunpack.c.h.b16 %v656
    %v711 = vunpack.c.l.b16 %v657
    %v712 = vunpack.c.h.b16 %v657
    %v713 = vunpack.c.l.b16 %v658
    %v714 = vunpack.c.h.b16 %v658
    %v715 = vpack.c.b16 %v685, %v683
    %v716 = vpack.c.b16 %v686, %v684
    %v717 = vpack.c.b16 %v689, %v687
    %v718 = vpack.c.b16 %v690, %v688
    %v719 = vpack.c.b16 %v693, %v691
    %v720 = vpack.c.b16 %v694, %v692
    %v721 = vpack.c.b16 %v697, %v695
    %v722 = vpack.c.b16 %v698, %v696
    %v723 = vpack.c.b16 %v701, %v699
    %v724 = vpack.c.b16 %v702, %v700
    %v725 = vpack.c.b16 %v705, %v703
    %v726 = vpack.c.b16 %v706, %v704
    %v727 = vpack.c.b16 %v709, %v707
    %v728 = vpack.c.b16 %v710, %v708
    %v729 = vpack.c.b16 %v713, %v711
    %v730 = vpack.c.b16 %v714, %v712
    %747 = vmatpush.bf16.msra.mxu0 %v729
    %748 = vmatpush.bf16.msra.mxu0 %v727
    %749 = vmatpush.bf16.msra.mxu0 %v725
    %750 = vmatpush.bf16.msra.mxu0 %v723
    %751 = vmatpush.bf16.msra.mxu0 %v721
    %752 = vmatpush.bf16.msra.mxu0 %v719
    %753 = vmatpush.bf16.msra.mxu0 %v717
    %754 = vmatpush.bf16.msra.mxu0 %v715
    %755 = vmatmul.bf16.gmra.mxu0 %v659
    %v756 = vpop.f32.mrf.mxu0
    %v757 = vadd.f32 %v663, %v756
    %v758 = vpop.f32.mrf.mxu0
    %759 = vdwg.mxu0
    %760 = vmatpush.bf16.msra.mxu0 %v730
    %761 = vmatpush.bf16.msra.mxu0 %v728
    %762 = vmatpush.bf16.msra.mxu0 %v726
    %763 = vmatpush.bf16.msra.mxu0 %v724
    %764 = vmatpush.bf16.msra.mxu0 %v722
    %765 = vmatpush.bf16.msra.mxu0 %v720
    %766 = vmatpush.bf16.msra.mxu0 %v718
    %767 = vmatpush.bf16.msra.mxu0 %v716
    %768 = vmatmul.bf16.gmra.mxu0 %v659
    %v769 = vpop.f32.mrf.mxu0
    %v770 = vadd.f32 %v664, %v769
    %v771 = vpop.f32.mrf.mxu0
    %772 = vdwg.mxu0
    %v773 = vmul.f32 %v626, %v757
    %774 = vadd.xlane.f32.xlu0 %v773
    %v775 = vpop.xlane.xlu0 %774
    %v776 = vmul.f32 %v626, %v639
    %777 = vadd.xlane.f32.xlu0 %v776
    %v778 = vpop.xlane.xlu0 %777
    %v779 = vmax.f32 %v775, %v778
    %v780 = vsub.f32 %v775, %v779
    %v781 = vmul.f32 %v780, 1.442695
    %v782 = vpow.pop %v781
    %v783 = vsub.f32 %v778, %v779
    %v784 = vmul.f32 %v783, 1.442695
    %v785 = vpow.pop %v784
    %v786 = vadd.f32 %v782, %v785
    %v787 = vrcp.pop %v786
    %v788 = vmul.f32 %v786, %v787
    %v789 = vsub.f32 1.0, %v788
    %v790 = vmul.f32 %v787, %v789
    %v791 = vadd.f32 %v787, %v790
    %vm792 = vweird.f32 %v786
    %vm793 = vweird.f32 %v787
    %vm794 = vmor %vm792, %vm793
    %v795 = vsel %vm794, %v787, %v791
    %v796 = vand.u32 2147483647, %v786
    %vm797 = vcmp.eq.f32.partialorder %v796, 8.507059e+37
    %v798 = vand.u32 %v786, 2147483648
    %v799 = vor.u32 1.1754944e-38, %v798
    %v800 = vsel %vm797, %v799, %v795
    %v801 = vmul.f32 1.0, %v800
    %v802 = vmul.f32 %v782, %v801
    %v803 = vmul.f32 %v785, %v801
    %v804 = vmul.f32 %v802, %v510
    %v805 = vmul.f32 %v803, %v478
    %v806 = vadd.f32 %v804, %v805
    %v807 = vmul.f32 %v806, %v806
    %808 = vadd.xlane.f32.xlu0 %v807
    %v809 = vpop.xlane.xlu0 %808
    %v810 = vrsqrt.pop %v809
    %v811 = vmul.f32 %v810, %v809
    %v812 = vmul.f32 %v811, %v810
    %v813 = vmul.f32 0.5, %v812
    %v814 = vsub.f32 1.5, %v813
    %v815 = vmul.f32 %v810, %v814
    %v816 = vmul.f32 %v809, %v815
    %vm817 = vcmp.eq.f32.partialorder %v809, inf
    %v818 = vsel %vm817, %v809, %v816
    %vm819 = vcmp.eq.f32.partialorder %v809, 0.0
    %v820 = vand.u32 %v809, 2147483648
    %v821 = vsel %vm819, %v820, %v818
    %v822 = vmax.f32 %v821, 1e-12
    %v823 = vrcp.pop %v822
    %v824 = vmul.f32 %v822, %v823
    %v825 = vsub.f32 1.0, %v824
    %v826 = vmul.f32 %v823, %v825
    %v827 = vadd.f32 %v823, %v826
    %vm828 = vweird.f32 %v822
    %vm829 = vweird.f32 %v823
    %vm830 = vmor %vm828, %vm829
    %v831 = vsel %vm830, %v823, %v827
    %v832 = vand.u32 2147483647, %v822
    %vm833 = vcmp.eq.f32.partialorder %v832, 8.507059e+37
    %v834 = vand.u32 %v822, 2147483648
    %v835 = vor.u32 1.1754944e-38, %v834
    %v836 = vsel %vm833, %v835, %v831
    %v837 = vmul.f32 %v806, %v836
    %s838 = scalar_lea.vmem %s5, 64
    %v839 = vld [vmem:[%s838] sm:$0xf]
    %v840 = vld [vmem:[%s838 + $0x4] sm:$0xf]
    %v841 = vld [vmem:[%s838 + $0x8] sm:$0xf]
    %v842 = vld [vmem:[%s838 + $0xc] sm:$0xf]
    %v843 = vld [vmem:[%s838 + $0x10] sm:$0xf]
    %v844 = vld [vmem:[%s838 + $0x14] sm:$0xf]
    %v845 = vld [vmem:[%s838 + $0x18] sm:$0xf]
    %v846 = vld [vmem:[%s838 + $0x1c] sm:$0xf]
    %v847 = vld [vmem:[%s838 + $0x20] sm:$0xf]
    %v848 = vld [vmem:[%s838 + $0x24] sm:$0xf]
    %v849 = vld [vmem:[%s838 + $0x28] sm:$0xf]
    %v850 = vld [vmem:[%s838 + $0x2c] sm:$0xf]
    %v851 = vld [vmem:[%s838 + $0x30] sm:$0xf]
    %v852 = vld [vmem:[%s838 + $0x34] sm:$0xf]
    %v853 = vld [vmem:[%s838 + $0x38] sm:$0xf]
    %v854 = vld [vmem:[%s838 + $0x3c] sm:$0xf]
    %v855 = vpack.c.bf16 %v837, %v837
    %s856 = scalar_lea.vmem %s6, 1
    %v857 = vld [vmem:[%s856] sm:$0x1]
    %v859 = vperm.slane %v857, 0
    %v877 = vunpack.c.l.b16 %v839
    %v878 = vunpack.c.l.b16 %v840
    %v879 = vunpack.c.l.b16 %v841
    %v880 = vunpack.c.l.b16 %v842
    %v881 = vunpack.c.l.b16 %v843
    %v882 = vunpack.c.l.b16 %v844
    %v883 = vunpack.c.l.b16 %v845
    %v884 = vunpack.c.l.b16 %v846
    %v885 = vunpack.c.l.b16 %v847
    %v886 = vunpack.c.l.b16 %v848
    %v887 = vunpack.c.l.b16 %v849
    %v888 = vunpack.c.l.b16 %v850
    %v889 = vunpack.c.l.b16 %v851
    %v890 = vunpack.c.l.b16 %v852
    %v891 = vunpack.c.l.b16 %v853
    %v892 = vunpack.c.l.b16 %v854
    %v893 = vpack.c.b16 %v878, %v877
    %v894 = vpack.c.b16 %v880, %v879
    %v895 = vpack.c.b16 %v882, %v881
    %v896 = vpack.c.b16 %v884, %v883
    %v897 = vpack.c.b16 %v886, %v885
    %v898 = vpack.c.b16 %v888, %v887
    %v899 = vpack.c.b16 %v890, %v889
    %v900 = vpack.c.b16 %v892, %v891
    %909 = vmatpush.bf16.msra.mxu0 %v900
    %910 = vmatpush.bf16.msra.mxu0 %v899
    %911 = vmatpush.bf16.msra.mxu0 %v898
    %912 = vmatpush.bf16.msra.mxu0 %v897
    %913 = vmatpush.bf16.msra.mxu0 %v896
    %914 = vmatpush.bf16.msra.mxu0 %v895
    %915 = vmatpush.bf16.msra.mxu0 %v894
    %916 = vmatpush.bf16.msra.mxu0 %v893
    %917 = vmatmul.bf16.gmra.mxu0 %v855
    %v918 = vpop.f32.mrf.mxu0
    %v919 = vadd.f32 %v859, %v918
    %v920 = vpop.f32.mrf.mxu0
    %921 = vdwg.mxu0
    %v922 = vadd.f32 %v919, %v478
    %v923 = vmul.f32 %v922, %v922
    %924 = vadd.xlane.f32.xlu0 %v923
    %v925 = vpop.xlane.xlu0 %924
    %v926 = vrsqrt.pop %v925
    %v927 = vmul.f32 %v926, %v925
    %v928 = vmul.f32 %v927, %v926
    %v929 = vmul.f32 0.5, %v928
    %v930 = vsub.f32 1.5, %v929
    %v931 = vmul.f32 %v926, %v930
    %v932 = vmul.f32 %v925, %v931
    %vm933 = vcmp.eq.f32.partialorder %v925, inf
    %v934 = vsel %vm933, %v925, %v932
    %vm935 = vcmp.eq.f32.partialorder %v925, 0.0
    %v936 = vand.u32 %v925, 2147483648
    %v937 = vsel %vm935, %v936, %v934
    %v938 = vmax.f32 %v937, 1e-12
    %v939 = vrcp.pop %v938
    %v940 = vmul.f32 %v938, %v939
    %v941 = vsub.f32 1.0, %v940
    %v942 = vmul.f32 %v939, %v941
    %v943 = vadd.f32 %v939, %v942
    %vm944 = vweird.f32 %v938
    %vm945 = vweird.f32 %v939
    %vm946 = vmor %vm944, %vm945
    %v947 = vsel %vm946, %v939, %v943
    %v948 = vand.u32 2147483647, %v938
    %vm949 = vcmp.eq.f32.partialorder %v948, 8.507059e+37
    %v950 = vand.u32 %v938, 2147483648
    %v951 = vor.u32 1.1754944e-38, %v950
    %v952 = vsel %vm949, %v951, %v947
    %v953 = vmul.f32 %v922, %v952
    %v954 = vadd.f32 %v770, %v510
    %v955 = vmul.f32 %v954, %v954
    %956 = vadd.xlane.f32.xlu0 %v955
    %v957 = vpop.xlane.xlu0 %956
    %v958 = vrsqrt.pop %v957
    %v959 = vmul.f32 %v958, %v957
    %v960 = vmul.f32 %v959, %v958
    %v961 = vmul.f32 0.5, %v960
    %v962 = vsub.f32 1.5, %v961
    %v963 = vmul.f32 %v958, %v962
    %v964 = vmul.f32 %v957, %v963
    %vm965 = vcmp.eq.f32.partialorder %v957, inf
    %v966 = vsel %vm965, %v957, %v964
    %vm967 = vcmp.eq.f32.partialorder %v957, 0.0
    %v968 = vand.u32 %v957, 2147483648
    %v969 = vsel %vm967, %v968, %v966
    %v970 = vmax.f32 %v969, 1e-12
    %v971 = vrcp.pop %v970
    %v972 = vmul.f32 %v970, %v971
    %v973 = vsub.f32 1.0, %v972
    %v974 = vmul.f32 %v971, %v973
    %v975 = vadd.f32 %v971, %v974
    %vm976 = vweird.f32 %v970
    %vm977 = vweird.f32 %v971
    %vm978 = vmor %vm976, %vm977
    %v979 = vsel %vm978, %v971, %v975
    %v980 = vand.u32 2147483647, %v970
    %vm981 = vcmp.eq.f32.partialorder %v980, 8.507059e+37
    %v982 = vand.u32 %v970, 2147483648
    %v983 = vor.u32 1.1754944e-38, %v982
    %v984 = vsel %vm981, %v983, %v979
    %v985 = vmul.f32 %v954, %v984
    %s986 = scalar_lea.vmem %s1, 256
    %v987 = vld [vmem:[%s986] sm:$0xff]
    %v988 = vld [vmem:[%s986 + $0x8] sm:$0xff]
    %v989 = vld [vmem:[%s986 + $0x10] sm:$0xff]
    %v990 = vld [vmem:[%s986 + $0x18] sm:$0xff]
    %v991 = vld [vmem:[%s986 + $0x20] sm:$0xff]
    %v992 = vld [vmem:[%s986 + $0x28] sm:$0xff]
    %v993 = vld [vmem:[%s986 + $0x30] sm:$0xff]
    %v994 = vld [vmem:[%s986 + $0x38] sm:$0xff]
    %v995 = vld [vmem:[%s986 + $0x40] sm:$0xff]
    %v996 = vld [vmem:[%s986 + $0x48] sm:$0xff]
    %v997 = vld [vmem:[%s986 + $0x50] sm:$0xff]
    %v998 = vld [vmem:[%s986 + $0x58] sm:$0xff]
    %v999 = vld [vmem:[%s986 + $0x60] sm:$0xff]
    %v1000 = vld [vmem:[%s986 + $0x68] sm:$0xff]
    %v1001 = vld [vmem:[%s986 + $0x70] sm:$0xff]
    %v1002 = vld [vmem:[%s986 + $0x78] sm:$0xff]
    %v1003 = vpack.c.bf16 %v953, %v953
    %s1004 = scalar_lea.vmem %s2, 4
    %v1005 = vld [vmem:[%s1004] sm:$0x3]
    %v1007 = vperm.slane %v1005, 0
    %v1008 = vperm.slane %v1005, 1
    %v1027 = vunpack.c.l.b16 %v987
    %v1028 = vunpack.c.h.b16 %v987
    %v1029 = vunpack.c.l.b16 %v988
    %v1030 = vunpack.c.h.b16 %v988
    %v1031 = vunpack.c.l.b16 %v989
    %v1032 = vunpack.c.h.b16 %v989
    %v1033 = vunpack.c.l.b16 %v990
    %v1034 = vunpack.c.h.b16 %v990
    %v1035 = vunpack.c.l.b16 %v991
    %v1036 = vunpack.c.h.b16 %v991
    %v1037 = vunpack.c.l.b16 %v992
    %v1038 = vunpack.c.h.b16 %v992
    %v1039 = vunpack.c.l.b16 %v993
    %v1040 = vunpack.c.h.b16 %v993
    %v1041 = vunpack.c.l.b16 %v994
    %v1042 = vunpack.c.h.b16 %v994
    %v1043 = vunpack.c.l.b16 %v995
    %v1044 = vunpack.c.h.b16 %v995
    %v1045 = vunpack.c.l.b16 %v996
    %v1046 = vunpack.c.h.b16 %v996
    %v1047 = vunpack.c.l.b16 %v997
    %v1048 = vunpack.c.h.b16 %v997
    %v1049 = vunpack.c.l.b16 %v998
    %v1050 = vunpack.c.h.b16 %v998
    %v1051 = vunpack.c.l.b16 %v999
    %v1052 = vunpack.c.h.b16 %v999
    %v1053 = vunpack.c.l.b16 %v1000
    %v1054 = vunpack.c.h.b16 %v1000
    %v1055 = vunpack.c.l.b16 %v1001
    %v1056 = vunpack.c.h.b16 %v1001
    %v1057 = vunpack.c.l.b16 %v1002
    %v1058 = vunpack.c.h.b16 %v1002
    %v1059 = vpack.c.b16 %v1029, %v1027
    %v1060 = vpack.c.b16 %v1030, %v1028
    %v1061 = vpack.c.b16 %v1033, %v1031
    %v1062 = vpack.c.b16 %v1034, %v1032
    %v1063 = vpack.c.b16 %v1037, %v1035
    %v1064 = vpack.c.b16 %v1038, %v1036
    %v1065 = vpack.c.b16 %v1041, %v1039
    %v1066 = vpack.c.b16 %v1042, %v1040
    %v1067 = vpack.c.b16 %v1045, %v1043
    %v1068 = vpack.c.b16 %v1046, %v1044
    %v1069 = vpack.c.b16 %v1049, %v1047
    %v1070 = vpack.c.b16 %v1050, %v1048
    %v1071 = vpack.c.b16 %v1053, %v1051
    %v1072 = vpack.c.b16 %v1054, %v1052
    %v1073 = vpack.c.b16 %v1057, %v1055
    %v1074 = vpack.c.b16 %v1058, %v1056
    %1091 = vmatpush.bf16.msra.mxu0 %v1073
    %1092 = vmatpush.bf16.msra.mxu0 %v1071
    %1093 = vmatpush.bf16.msra.mxu0 %v1069
    %1094 = vmatpush.bf16.msra.mxu0 %v1067
    %1095 = vmatpush.bf16.msra.mxu0 %v1065
    %1096 = vmatpush.bf16.msra.mxu0 %v1063
    %1097 = vmatpush.bf16.msra.mxu0 %v1061
    %1098 = vmatpush.bf16.msra.mxu0 %v1059
    %1099 = vmatmul.bf16.gmra.mxu0 %v1003
    %v1100 = vpop.f32.mrf.mxu0
    %v1101 = vadd.f32 %v1007, %v1100
    %v1102 = vpop.f32.mrf.mxu0
    %1103 = vdwg.mxu0
    %1104 = vmatpush.bf16.msra.mxu0 %v1074
    %1105 = vmatpush.bf16.msra.mxu0 %v1072
    %1106 = vmatpush.bf16.msra.mxu0 %v1070
    %1107 = vmatpush.bf16.msra.mxu0 %v1068
    %1108 = vmatpush.bf16.msra.mxu0 %v1066
    %1109 = vmatpush.bf16.msra.mxu0 %v1064
    %1110 = vmatpush.bf16.msra.mxu0 %v1062
    %1111 = vmatpush.bf16.msra.mxu0 %v1060
    %1112 = vmatmul.bf16.gmra.mxu0 %v1003
    %v1113 = vpop.f32.mrf.mxu0
    %v1114 = vadd.f32 %v1008, %v1113
    %v1115 = vpop.f32.mrf.mxu0
    %1116 = vdwg.mxu0
    %s1117 = scalar_lea.vmem %s3, 256
    %v1118 = vld [vmem:[%s1117] sm:$0xff]
    %v1119 = vld [vmem:[%s1117 + $0x8] sm:$0xff]
    %v1120 = vld [vmem:[%s1117 + $0x10] sm:$0xff]
    %v1121 = vld [vmem:[%s1117 + $0x18] sm:$0xff]
    %v1122 = vld [vmem:[%s1117 + $0x20] sm:$0xff]
    %v1123 = vld [vmem:[%s1117 + $0x28] sm:$0xff]
    %v1124 = vld [vmem:[%s1117 + $0x30] sm:$0xff]
    %v1125 = vld [vmem:[%s1117 + $0x38] sm:$0xff]
    %v1126 = vld [vmem:[%s1117 + $0x40] sm:$0xff]
    %v1127 = vld [vmem:[%s1117 + $0x48] sm:$0xff]
    %v1128 = vld [vmem:[%s1117 + $0x50] sm:$0xff]
    %v1129 = vld [vmem:[%s1117 + $0x58] sm:$0xff]
    %v1130 = vld [vmem:[%s1117 + $0x60] sm:$0xff]
    %v1131 = vld [vmem:[%s1117 + $0x68] sm:$0xff]
    %v1132 = vld [vmem:[%s1117 + $0x70] sm:$0xff]
    %v1133 = vld [vmem:[%s1117 + $0x78] sm:$0xff]
    %v1134 = vpack.c.bf16 %v985, %v985
    %s1135 = scalar_lea.vmem %s4, 4
    %v1136 = vld [vmem:[%s1135] sm:$0x3]
    %v1138 = vperm.slane %v1136, 0
    %v1139 = vperm.slane %v1136, 1
    %v1158 = vunpack.c.l.b16 %v1118
    %v1159 = vunpack.c.h.b16 %v1118
    %v1160 = vunpack.c.l.b16 %v1119
    %v1161 = vunpack.c.h.b16 %v1119
    %v1162 = vunpack.c.l.b16 %v1120
    %v1163 = vunpack.c.h.b16 %v1120
    %v1164 = vunpack.c.l.b16 %v1121
    %v1165 = vunpack.c.h.b16 %v1121
    %v1166 = vunpack.c.l.b16 %v1122
    %v1167 = vunpack.c.h.b16 %v1122
    %v1168 = vunpack.c.l.b16 %v1123
    %v1169 = vunpack.c.h.b16 %v1123
    %v1170 = vunpack.c.l.b16 %v1124
    %v1171 = vunpack.c.h.b16 %v1124
    %v1172 = vunpack.c.l.b16 %v1125
    %v1173 = vunpack.c.h.b16 %v1125
    %v1174 = vunpack.c.l.b16 %v1126
    %v1175 = vunpack.c.h.b16 %v1126
    %v1176 = vunpack.c.l.b16 %v1127
    %v1177 = vunpack.c.h.b16 %v1127
    %v1178 = vunpack.c.l.b16 %v1128
    %v1179 = vunpack.c.h.b16 %v1128
    %v1180 = vunpack.c.l.b16 %v1129
    %v1181 = vunpack.c.h.b16 %v1129
    %v1182 = vunpack.c.l.b16 %v1130
    %v1183 = vunpack.c.h.b16 %v1130
    %v1184 = vunpack.c.l.b16 %v1131
    %v1185 = vunpack.c.h.b16 %v1131
    %v1186 = vunpack.c.l.b16 %v1132
    %v1187 = vunpack.c.h.b16 %v1132
    %v1188 = vunpack.c.l.b16 %v1133
    %v1189 = vunpack.c.h.b16 %v1133
    %v1190 = vpack.c.b16 %v1160, %v1158
    %v1191 = vpack.c.b16 %v1161, %v1159
    %v1192 = vpack.c.b16 %v1164, %v1162
    %v1193 = vpack.c.b16 %v1165, %v1163
    %v1194 = vpack.c.b16 %v1168, %v1166
    %v1195 = vpack.c.b16 %v1169, %v1167
    %v1196 = vpack.c.b16 %v1172, %v1170
    %v1197 = vpack.c.b16 %v1173, %v1171
    %v1198 = vpack.c.b16 %v1176, %v1174
    %v1199 = vpack.c.b16 %v1177, %v1175
    %v1200 = vpack.c.b16 %v1180, %v1178
    %v1201 = vpack.c.b16 %v1181, %v1179
    %v1202 = vpack.c.b16 %v1184, %v1182
    %v1203 = vpack.c.b16 %v1185, %v1183
    %v1204 = vpack.c.b16 %v1188, %v1186
    %v1205 = vpack.c.b16 %v1189, %v1187
    %1222 = vmatpush.bf16.msra.mxu0 %v1204
    %1223 = vmatpush.bf16.msra.mxu0 %v1202
    %1224 = vmatpush.bf16.msra.mxu0 %v1200
    %1225 = vmatpush.bf16.msra.mxu0 %v1198
    %1226 = vmatpush.bf16.msra.mxu0 %v1196
    %1227 = vmatpush.bf16.msra.mxu0 %v1194
    %1228 = vmatpush.bf16.msra.mxu0 %v1192
    %1229 = vmatpush.bf16.msra.mxu0 %v1190
    %1230 = vmatmul.bf16.gmra.mxu0 %v1134
    %v1231 = vpop.f32.mrf.mxu0
    %v1232 = vadd.f32 %v1138, %v1231
    %v1233 = vpop.f32.mrf.mxu0
    %1234 = vdwg.mxu0
    %1235 = vmatpush.bf16.msra.mxu0 %v1205
    %1236 = vmatpush.bf16.msra.mxu0 %v1203
    %1237 = vmatpush.bf16.msra.mxu0 %v1201
    %1238 = vmatpush.bf16.msra.mxu0 %v1199
    %1239 = vmatpush.bf16.msra.mxu0 %v1197
    %1240 = vmatpush.bf16.msra.mxu0 %v1195
    %1241 = vmatpush.bf16.msra.mxu0 %v1193
    %1242 = vmatpush.bf16.msra.mxu0 %v1191
    %1243 = vmatmul.bf16.gmra.mxu0 %v1134
    %v1244 = vpop.f32.mrf.mxu0
    %v1245 = vadd.f32 %v1139, %v1244
    %v1246 = vpop.f32.mrf.mxu0
    %1247 = vdwg.mxu0
    %v1248 = vmul.f32 %v1101, %v1232
    %1249 = vadd.xlane.f32.xlu0 %v1248
    %v1250 = vpop.xlane.xlu0 %1249
    %v1251 = vmul.f32 %v1101, %v1114
    %1252 = vadd.xlane.f32.xlu0 %v1251
    %v1253 = vpop.xlane.xlu0 %1252
    %v1254 = vmax.f32 %v1250, %v1253
    %v1255 = vsub.f32 %v1250, %v1254
    %v1256 = vmul.f32 %v1255, 1.442695
    %v1257 = vpow.pop %v1256
    %v1258 = vsub.f32 %v1253, %v1254
    %v1259 = vmul.f32 %v1258, 1.442695
    %v1260 = vpow.pop %v1259
    %v1261 = vadd.f32 %v1257, %v1260
    %v1262 = vrcp.pop %v1261
    %v1263 = vmul.f32 %v1261, %v1262
    %v1264 = vsub.f32 1.0, %v1263
    %v1265 = vmul.f32 %v1262, %v1264
    %v1266 = vadd.f32 %v1262, %v1265
    %vm1267 = vweird.f32 %v1261
    %vm1268 = vweird.f32 %v1262
    %vm1269 = vmor %vm1267, %vm1268
    %v1270 = vsel %vm1269, %v1262, %v1266
    %v1271 = vand.u32 2147483647, %v1261
    %vm1272 = vcmp.eq.f32.partialorder %v1271, 8.507059e+37
    %v1273 = vand.u32 %v1261, 2147483648
    %v1274 = vor.u32 1.1754944e-38, %v1273
    %v1275 = vsel %vm1272, %v1274, %v1270
    %v1276 = vmul.f32 1.0, %v1275
    %v1277 = vmul.f32 %v1257, %v1276
    %v1278 = vmul.f32 %v1260, %v1276
    %v1279 = vmul.f32 %v1277, %v985
    %v1280 = vmul.f32 %v1278, %v953
    %v1281 = vadd.f32 %v1279, %v1280
    %v1282 = vmul.f32 %v1281, %v1281
    %1283 = vadd.xlane.f32.xlu0 %v1282
    %v1284 = vpop.xlane.xlu0 %1283
    %v1285 = vrsqrt.pop %v1284
    %v1286 = vmul.f32 %v1285, %v1284
    %v1287 = vmul.f32 %v1286, %v1285
    %v1288 = vmul.f32 0.5, %v1287
    %v1289 = vsub.f32 1.5, %v1288
    %v1290 = vmul.f32 %v1285, %v1289
    %v1291 = vmul.f32 %v1284, %v1290
    %vm1292 = vcmp.eq.f32.partialorder %v1284, inf
    %v1293 = vsel %vm1292, %v1284, %v1291
    %vm1294 = vcmp.eq.f32.partialorder %v1284, 0.0
    %v1295 = vand.u32 %v1284, 2147483648
    %v1296 = vsel %vm1294, %v1295, %v1293
    %v1297 = vmax.f32 %v1296, 1e-12
    %v1298 = vrcp.pop %v1297
    %v1299 = vmul.f32 %v1297, %v1298
    %v1300 = vsub.f32 1.0, %v1299
    %v1301 = vmul.f32 %v1298, %v1300
    %v1302 = vadd.f32 %v1298, %v1301
    %vm1303 = vweird.f32 %v1297
    %vm1304 = vweird.f32 %v1298
    %vm1305 = vmor %vm1303, %vm1304
    %v1306 = vsel %vm1305, %v1298, %v1302
    %v1307 = vand.u32 2147483647, %v1297
    %vm1308 = vcmp.eq.f32.partialorder %v1307, 8.507059e+37
    %v1309 = vand.u32 %v1297, 2147483648
    %v1310 = vor.u32 1.1754944e-38, %v1309
    %v1311 = vsel %vm1308, %v1310, %v1306
    %v1312 = vmul.f32 %v1281, %v1311
    %s1313 = scalar_lea.vmem %s5, 128
    %v1314 = vld [vmem:[%s1313] sm:$0xf]
    %v1315 = vld [vmem:[%s1313 + $0x4] sm:$0xf]
    %v1316 = vld [vmem:[%s1313 + $0x8] sm:$0xf]
    %v1317 = vld [vmem:[%s1313 + $0xc] sm:$0xf]
    %v1318 = vld [vmem:[%s1313 + $0x10] sm:$0xf]
    %v1319 = vld [vmem:[%s1313 + $0x14] sm:$0xf]
    %v1320 = vld [vmem:[%s1313 + $0x18] sm:$0xf]
    %v1321 = vld [vmem:[%s1313 + $0x1c] sm:$0xf]
    %v1322 = vld [vmem:[%s1313 + $0x20] sm:$0xf]
    %v1323 = vld [vmem:[%s1313 + $0x24] sm:$0xf]
    %v1324 = vld [vmem:[%s1313 + $0x28] sm:$0xf]
    %v1325 = vld [vmem:[%s1313 + $0x2c] sm:$0xf]
    %v1326 = vld [vmem:[%s1313 + $0x30] sm:$0xf]
    %v1327 = vld [vmem:[%s1313 + $0x34] sm:$0xf]
    %v1328 = vld [vmem:[%s1313 + $0x38] sm:$0xf]
    %v1329 = vld [vmem:[%s1313 + $0x3c] sm:$0xf]
    %v1330 = vpack.c.bf16 %v1312, %v1312
    %s1331 = scalar_lea.vmem %s6, 2
    %v1332 = vld [vmem:[%s1331] sm:$0x1]
    %v1334 = vperm.slane %v1332, 0
    %v1352 = vunpack.c.l.b16 %v1314
    %v1353 = vunpack.c.l.b16 %v1315
    %v1354 = vunpack.c.l.b16 %v1316
    %v1355 = vunpack.c.l.b16 %v1317
    %v1356 = vunpack.c.l.b16 %v1318
    %v1357 = vunpack.c.l.b16 %v1319
    %v1358 = vunpack.c.l.b16 %v1320
    %v1359 = vunpack.c.l.b16 %v1321
    %v1360 = vunpack.c.l.b16 %v1322
    %v1361 = vunpack.c.l.b16 %v1323
    %v1362 = vunpack.c.l.b16 %v1324
    %v1363 = vunpack.c.l.b16 %v1325
    %v1364 = vunpack.c.l.b16 %v1326
    %v1365 = vunpack.c.l.b16 %v1327
    %v1366 = vunpack.c.l.b16 %v1328
    %v1367 = vunpack.c.l.b16 %v1329
    %v1368 = vpack.c.b16 %v1353, %v1352
    %v1369 = vpack.c.b16 %v1355, %v1354
    %v1370 = vpack.c.b16 %v1357, %v1356
    %v1371 = vpack.c.b16 %v1359, %v1358
    %v1372 = vpack.c.b16 %v1361, %v1360
    %v1373 = vpack.c.b16 %v1363, %v1362
    %v1374 = vpack.c.b16 %v1365, %v1364
    %v1375 = vpack.c.b16 %v1367, %v1366
    %1384 = vmatpush.bf16.msra.mxu0 %v1375
    %1385 = vmatpush.bf16.msra.mxu0 %v1374
    %1386 = vmatpush.bf16.msra.mxu0 %v1373
    %1387 = vmatpush.bf16.msra.mxu0 %v1372
    %1388 = vmatpush.bf16.msra.mxu0 %v1371
    %1389 = vmatpush.bf16.msra.mxu0 %v1370
    %1390 = vmatpush.bf16.msra.mxu0 %v1369
    %1391 = vmatpush.bf16.msra.mxu0 %v1368
    %1392 = vmatmul.bf16.gmra.mxu0 %v1330
    %v1393 = vpop.f32.mrf.mxu0
    %v1394 = vadd.f32 %v1334, %v1393
    %v1395 = vpop.f32.mrf.mxu0
    %1396 = vdwg.mxu0
    %v1397 = vadd.f32 %v1394, %v953
    %v1398 = vmul.f32 %v1397, %v1397
    %1399 = vadd.xlane.f32.xlu0 %v1398
    %v1400 = vpop.xlane.xlu0 %1399
    %v1401 = vrsqrt.pop %v1400
    %v1402 = vmul.f32 %v1401, %v1400
    %v1403 = vmul.f32 %v1402, %v1401
    %v1404 = vmul.f32 0.5, %v1403
    %v1405 = vsub.f32 1.5, %v1404
    %v1406 = vmul.f32 %v1401, %v1405
    %v1407 = vmul.f32 %v1400, %v1406
    %vm1408 = vcmp.eq.f32.partialorder %v1400, inf
    %v1409 = vsel %vm1408, %v1400, %v1407
    %vm1410 = vcmp.eq.f32.partialorder %v1400, 0.0
    %v1411 = vand.u32 %v1400, 2147483648
    %v1412 = vsel %vm1410, %v1411, %v1409
    %v1413 = vmax.f32 %v1412, 1e-12
    %v1414 = vrcp.pop %v1413
    %v1415 = vmul.f32 %v1413, %v1414
    %v1416 = vsub.f32 1.0, %v1415
    %v1417 = vmul.f32 %v1414, %v1416
    %v1418 = vadd.f32 %v1414, %v1417
    %vm1419 = vweird.f32 %v1413
    %vm1420 = vweird.f32 %v1414
    %vm1421 = vmor %vm1419, %vm1420
    %v1422 = vsel %vm1421, %v1414, %v1418
    %v1423 = vand.u32 2147483647, %v1413
    %vm1424 = vcmp.eq.f32.partialorder %v1423, 8.507059e+37
    %v1425 = vand.u32 %v1413, 2147483648
    %v1426 = vor.u32 1.1754944e-38, %v1425
    %v1427 = vsel %vm1424, %v1426, %v1422
    %v1428 = vmul.f32 %v1397, %v1427
    %v1429 = vadd.f32 %v1245, %v985
    %v1430 = vmul.f32 %v1429, %v1429
    %1431 = vadd.xlane.f32.xlu0 %v1430
    %v1432 = vpop.xlane.xlu0 %1431
    %v1433 = vrsqrt.pop %v1432
    %v1434 = vmul.f32 %v1433, %v1432
    %v1435 = vmul.f32 %v1434, %v1433
    %v1436 = vmul.f32 0.5, %v1435
    %v1437 = vsub.f32 1.5, %v1436
    %v1438 = vmul.f32 %v1433, %v1437
    %v1439 = vmul.f32 %v1432, %v1438
    %vm1440 = vcmp.eq.f32.partialorder %v1432, inf
    %v1441 = vsel %vm1440, %v1432, %v1439
    %vm1442 = vcmp.eq.f32.partialorder %v1432, 0.0
    %v1443 = vand.u32 %v1432, 2147483648
    %v1444 = vsel %vm1442, %v1443, %v1441
    %v1445 = vmax.f32 %v1444, 1e-12
    %v1446 = vrcp.pop %v1445
    %v1447 = vmul.f32 %v1445, %v1446
    %v1448 = vsub.f32 1.0, %v1447
    %v1449 = vmul.f32 %v1446, %v1448
    %v1450 = vadd.f32 %v1446, %v1449
    %vm1451 = vweird.f32 %v1445
    %vm1452 = vweird.f32 %v1446
    %vm1453 = vmor %vm1451, %vm1452
    %v1454 = vsel %vm1453, %v1446, %v1450
    %v1455 = vand.u32 2147483647, %v1445
    %vm1456 = vcmp.eq.f32.partialorder %v1455, 8.507059e+37
    %v1457 = vand.u32 %v1445, 2147483648
    %v1458 = vor.u32 1.1754944e-38, %v1457
    %v1459 = vsel %vm1456, %v1458, %v1454
    %v1460 = vmul.f32 %v1429, %v1459
    %v1461 = vld [vmem:[%s7] sm:$0xff]
    %v1462 = vld [vmem:[%s7 + $0x8] sm:$0xff]
    %v1463 = vld [vmem:[%s7 + $0x10] sm:$0xff]
    %v1464 = vld [vmem:[%s7 + $0x18] sm:$0xff]
    %v1465 = vld [vmem:[%s7 + $0x20] sm:$0xff]
    %v1466 = vld [vmem:[%s7 + $0x28] sm:$0xff]
    %v1467 = vld [vmem:[%s7 + $0x30] sm:$0xff]
    %v1468 = vld [vmem:[%s7 + $0x38] sm:$0xff]
    %v1469 = vld [vmem:[%s7 + $0x40] sm:$0xff]
    %v1470 = vld [vmem:[%s7 + $0x48] sm:$0xff]
    %v1471 = vld [vmem:[%s7 + $0x50] sm:$0xff]
    %v1472 = vld [vmem:[%s7 + $0x58] sm:$0xff]
    %v1473 = vld [vmem:[%s7 + $0x60] sm:$0xff]
    %v1474 = vld [vmem:[%s7 + $0x68] sm:$0xff]
    %v1475 = vld [vmem:[%s7 + $0x70] sm:$0xff]
    %v1476 = vld [vmem:[%s7 + $0x78] sm:$0xff]
    %v1477 = vpack.c.bf16 %v1428, %v1428
    %v1478 = vld [vmem:[%s8] sm:$0x3]
    %v1480 = vperm.slane %v1478, 0
    %v1481 = vperm.slane %v1478, 1
    %v1500 = vunpack.c.l.b16 %v1461
    %v1501 = vunpack.c.h.b16 %v1461
    %v1502 = vunpack.c.l.b16 %v1462
    %v1503 = vunpack.c.h.b16 %v1462
    %v1504 = vunpack.c.l.b16 %v1463
    %v1505 = vunpack.c.h.b16 %v1463
    %v1506 = vunpack.c.l.b16 %v1464
    %v1507 = vunpack.c.h.b16 %v1464
    %v1508 = vunpack.c.l.b16 %v1465
    %v1509 = vunpack.c.h.b16 %v1465
    %v1510 = vunpack.c.l.b16 %v1466
    %v1511 = vunpack.c.h.b16 %v1466
    %v1512 = vunpack.c.l.b16 %v1467
    %v1513 = vunpack.c.h.b16 %v1467
    %v1514 = vunpack.c.l.b16 %v1468
    %v1515 = vunpack.c.h.b16 %v1468
    %v1516 = vunpack.c.l.b16 %v1469
    %v1517 = vunpack.c.h.b16 %v1469
    %v1518 = vunpack.c.l.b16 %v1470
    %v1519 = vunpack.c.h.b16 %v1470
    %v1520 = vunpack.c.l.b16 %v1471
    %v1521 = vunpack.c.h.b16 %v1471
    %v1522 = vunpack.c.l.b16 %v1472
    %v1523 = vunpack.c.h.b16 %v1472
    %v1524 = vunpack.c.l.b16 %v1473
    %v1525 = vunpack.c.h.b16 %v1473
    %v1526 = vunpack.c.l.b16 %v1474
    %v1527 = vunpack.c.h.b16 %v1474
    %v1528 = vunpack.c.l.b16 %v1475
    %v1529 = vunpack.c.h.b16 %v1475
    %v1530 = vunpack.c.l.b16 %v1476
    %v1531 = vunpack.c.h.b16 %v1476
    %v1532 = vpack.c.b16 %v1502, %v1500
    %v1533 = vpack.c.b16 %v1503, %v1501
    %v1534 = vpack.c.b16 %v1506, %v1504
    %v1535 = vpack.c.b16 %v1507, %v1505
    %v1536 = vpack.c.b16 %v1510, %v1508
    %v1537 = vpack.c.b16 %v1511, %v1509
    %v1538 = vpack.c.b16 %v1514, %v1512
    %v1539 = vpack.c.b16 %v1515, %v1513
    %v1540 = vpack.c.b16 %v1518, %v1516
    %v1541 = vpack.c.b16 %v1519, %v1517
    %v1542 = vpack.c.b16 %v1522, %v1520
    %v1543 = vpack.c.b16 %v1523, %v1521
    %v1544 = vpack.c.b16 %v1526, %v1524
    %v1545 = vpack.c.b16 %v1527, %v1525
    %v1546 = vpack.c.b16 %v1530, %v1528
    %v1547 = vpack.c.b16 %v1531, %v1529
    %1564 = vmatpush.bf16.msra.mxu0 %v1546
    %1565 = vmatpush.bf16.msra.mxu0 %v1544
    %1566 = vmatpush.bf16.msra.mxu0 %v1542
    %1567 = vmatpush.bf16.msra.mxu0 %v1540
    %1568 = vmatpush.bf16.msra.mxu0 %v1538
    %1569 = vmatpush.bf16.msra.mxu0 %v1536
    %1570 = vmatpush.bf16.msra.mxu0 %v1534
    %1571 = vmatpush.bf16.msra.mxu0 %v1532
    %1572 = vmatmul.bf16.gmra.mxu0 %v1477
    %v1573 = vpop.f32.mrf.mxu0
    %v1574 = vadd.f32 %v1480, %v1573
    %v1575 = vpop.f32.mrf.mxu0
    %1576 = vdwg.mxu0
    %1577 = vmatpush.bf16.msra.mxu0 %v1547
    %1578 = vmatpush.bf16.msra.mxu0 %v1545
    %1579 = vmatpush.bf16.msra.mxu0 %v1543
    %1580 = vmatpush.bf16.msra.mxu0 %v1541
    %1581 = vmatpush.bf16.msra.mxu0 %v1539
    %1582 = vmatpush.bf16.msra.mxu0 %v1537
    %1583 = vmatpush.bf16.msra.mxu0 %v1535
    %1584 = vmatpush.bf16.msra.mxu0 %v1533
    %1585 = vmatmul.bf16.gmra.mxu0 %v1477
    %v1586 = vpop.f32.mrf.mxu0
    %v1587 = vadd.f32 %v1481, %v1586
    %v1588 = vpop.f32.mrf.mxu0
    %1589 = vdwg.mxu0
    %v1590 = vld [vmem:[%s9] sm:$0xf]
    %v1591 = vld [vmem:[%s9 + $0x4] sm:$0xf]
    %v1592 = vld [vmem:[%s9 + $0x8] sm:$0xf]
    %v1593 = vld [vmem:[%s9 + $0xc] sm:$0xf]
    %v1594 = vld [vmem:[%s9 + $0x10] sm:$0xf]
    %v1595 = vld [vmem:[%s9 + $0x14] sm:$0xf]
    %v1596 = vld [vmem:[%s9 + $0x18] sm:$0xf]
    %v1597 = vld [vmem:[%s9 + $0x1c] sm:$0xf]
    %v1598 = vld [vmem:[%s9 + $0x20] sm:$0xf]
    %v1599 = vld [vmem:[%s9 + $0x24] sm:$0xf]
    %v1600 = vld [vmem:[%s9 + $0x28] sm:$0xf]
    %v1601 = vld [vmem:[%s9 + $0x2c] sm:$0xf]
    %v1602 = vld [vmem:[%s9 + $0x30] sm:$0xf]
    %v1603 = vld [vmem:[%s9 + $0x34] sm:$0xf]
    %v1604 = vld [vmem:[%s9 + $0x38] sm:$0xf]
    %v1605 = vld [vmem:[%s9 + $0x3c] sm:$0xf]
    %v1606 = vpack.c.bf16 %v1460, %v1460
    %v1607 = vld [vmem:[%s10] sm:$0x1]
    %v1609 = vperm.slane %v1607, 0
    %v1627 = vunpack.c.l.b16 %v1590
    %v1628 = vunpack.c.l.b16 %v1591
    %v1629 = vunpack.c.l.b16 %v1592
    %v1630 = vunpack.c.l.b16 %v1593
    %v1631 = vunpack.c.l.b16 %v1594
    %v1632 = vunpack.c.l.b16 %v1595
    %v1633 = vunpack.c.l.b16 %v1596
    %v1634 = vunpack.c.l.b16 %v1597
    %v1635 = vunpack.c.l.b16 %v1598
    %v1636 = vunpack.c.l.b16 %v1599
    %v1637 = vunpack.c.l.b16 %v1600
    %v1638 = vunpack.c.l.b16 %v1601
    %v1639 = vunpack.c.l.b16 %v1602
    %v1640 = vunpack.c.l.b16 %v1603
    %v1641 = vunpack.c.l.b16 %v1604
    %v1642 = vunpack.c.l.b16 %v1605
    %v1643 = vpack.c.b16 %v1628, %v1627
    %v1644 = vpack.c.b16 %v1630, %v1629
    %v1645 = vpack.c.b16 %v1632, %v1631
    %v1646 = vpack.c.b16 %v1634, %v1633
    %v1647 = vpack.c.b16 %v1636, %v1635
    %v1648 = vpack.c.b16 %v1638, %v1637
    %v1649 = vpack.c.b16 %v1640, %v1639
    %v1650 = vpack.c.b16 %v1642, %v1641
    %1659 = vmatpush.bf16.msra.mxu0 %v1650
    %1660 = vmatpush.bf16.msra.mxu0 %v1649
    %1661 = vmatpush.bf16.msra.mxu0 %v1648
    %1662 = vmatpush.bf16.msra.mxu0 %v1647
    %1663 = vmatpush.bf16.msra.mxu0 %v1646
    %1664 = vmatpush.bf16.msra.mxu0 %v1645
    %1665 = vmatpush.bf16.msra.mxu0 %v1644
    %1666 = vmatpush.bf16.msra.mxu0 %v1643
    %1667 = vmatmul.bf16.gmra.mxu0 %v1606
    %v1668 = vpop.f32.mrf.mxu0
    %v1669 = vadd.f32 %v1609, %v1668
    %v1670 = vpop.f32.mrf.mxu0
    %1671 = vdwg.mxu0
    %v1672 = vmul.f32 %v1574, %v1669
    %1673 = vadd.xlane.f32.xlu0 %v1672
    %v1674 = vpop.xlane.xlu0 %1673
    %v1675 = vmul.f32 %v1574, %v1587
    %1676 = vadd.xlane.f32.xlu0 %v1675
    %v1677 = vpop.xlane.xlu0 %1676
    %v1678 = vmax.f32 %v1674, %v1677
    %v1679 = vsub.f32 %v1674, %v1678
    %v1680 = vmul.f32 %v1679, 1.442695
    %v1681 = vpow.pop %v1680
    %v1682 = vsub.f32 %v1677, %v1678
    %v1683 = vmul.f32 %v1682, 1.442695
    %v1684 = vpow.pop %v1683
    %v1685 = vadd.f32 %v1681, %v1684
    %v1686 = vrcp.pop %v1685
    %v1687 = vmul.f32 %v1685, %v1686
    %v1688 = vsub.f32 1.0, %v1687
    %v1689 = vmul.f32 %v1686, %v1688
    %v1690 = vadd.f32 %v1686, %v1689
    %vm1691 = vweird.f32 %v1685
    %vm1692 = vweird.f32 %v1686
    %vm1693 = vmor %vm1691, %vm1692
    %v1694 = vsel %vm1693, %v1686, %v1690
    %v1695 = vand.u32 2147483647, %v1685
    %vm1696 = vcmp.eq.f32.partialorder %v1695, 8.507059e+37
    %v1697 = vand.u32 %v1685, 2147483648
    %v1698 = vor.u32 1.1754944e-38, %v1697
    %v1699 = vsel %vm1696, %v1698, %v1694
    %v1700 = vmul.f32 1.0, %v1699
    %v1701 = vmul.f32 %v1681, %v1700
    %v1702 = vmul.f32 %v1684, %v1700
    %v1703 = vmul.f32 %v1701, %v1460
    %v1704 = vmul.f32 %v1702, %v1428
    %v1705 = vadd.f32 %v1703, %v1704
    %v1706 = vadd.f32 %v1705, %v1428
    %v1707 = vmul.f32 %v1706, %v1706
    %1708 = vadd.xlane.f32.xlu0 %v1707
    %v1709 = vpop.xlane.xlu0 %1708
    %v1710 = vrsqrt.pop %v1709
    %v1711 = vmul.f32 %v1710, %v1709
    %v1712 = vmul.f32 %v1711, %v1710
    %v1713 = vmul.f32 0.5, %v1712
    %v1714 = vsub.f32 1.5, %v1713
    %v1715 = vmul.f32 %v1710, %v1714
    %v1716 = vmul.f32 %v1709, %v1715
    %vm1717 = vcmp.eq.f32.partialorder %v1709, inf
    %v1718 = vsel %vm1717, %v1709, %v1716
    %vm1719 = vcmp.eq.f32.partialorder %v1709, 0.0
    %v1720 = vand.u32 %v1709, 2147483648
    %v1721 = vsel %vm1719, %v1720, %v1718
    %v1722 = vmax.f32 %v1721, 1e-12
    %v1723 = vrcp.pop %v1722
    %v1724 = vmul.f32 %v1722, %v1723
    %v1725 = vsub.f32 1.0, %v1724
    %v1726 = vmul.f32 %v1723, %v1725
    %v1727 = vadd.f32 %v1723, %v1726
    %vm1728 = vweird.f32 %v1722
    %vm1729 = vweird.f32 %v1723
    %vm1730 = vmor %vm1728, %vm1729
    %v1731 = vsel %vm1730, %v1723, %v1727
    %v1732 = vand.u32 2147483647, %v1722
    %vm1733 = vcmp.eq.f32.partialorder %v1732, 8.507059e+37
    %v1734 = vand.u32 %v1722, 2147483648
    %v1735 = vor.u32 1.1754944e-38, %v1734
    %v1736 = vsel %vm1733, %v1735, %v1731
    %v1737 = vmul.f32 %v1706, %v1736
    %1738 = vst [vmem:[#allocation2] sm:$0xff] %v1737
    // Predicated region
    $region46: #{positional_transformer.1} parent=1 // pred_check
      _
    $region47: #{positional_transformer.1} parent=1 // pred_check_branch
      %1740 = sbr.rel (0) target = $region49
    $region48: #{positional_transformer.1} parent=1 // pred_region
      %1742 = vsyncadd [#allocation3], 0
      %s1744 = sshll.u32 [#allocation2], 4
      %s1745 = int_to_ptr.vmem [resolvable:$true] %s1744
      %s1746 = sshll.u32 %s11, 4
      %s1747 = int_to_ptr.hbm [resolvable:$true] %s1746
      %1749 = dma.vmem_to_hbm [thread:$0]  %s1745, 128, %s1747, [#allocation3]
    $region49: #{positional_transformer.1} parent=1 // pred_fallthru
      _
    // Predicated region
    $region50: #{positional_transformer.1} parent=1 // pred_check
      _
    $region51: #{positional_transformer.1} parent=1 // pred_check_branch
      %1751 = sbr.rel (0) target = $region53
    $region52: #{positional_transformer.1} parent=1 // pred_region
      %1753 = dma.done [#allocation3], 128
    $region53: #{positional_transformer.1} parent=1 // pred_fallthru
      _
    %1754 = vsyncpa [#allocation3], 1

</llo_original>
